<compile_context>
chip_gen: v7x
topology: tpu7x:2x2x1
jax: 0.10.0
libtpu: 0.0.40
codegen_flags: <defaults>
</compile_context>

<pallas_src>
import functools

import jax
import jax.numpy as jnp
from jax import lax
from jax.experimental import pallas as pl
from jax.experimental.pallas import tpu as pltpu


def _attn_kernel(q_ref, k_ref, v_ref, inv_ref, *rest, keep_scale, has_mask):
    if has_mask:
        mask_ref, o_ref, m_ref, l_ref, acc_ref = rest
    else:
        o_ref, m_ref, l_ref, acc_ref = rest
        mask_ref = None

    ki = pl.program_id(2)

    @pl.when(ki == 0)
    def _init():
        m_ref[...] = jnp.full(m_ref.shape, -jnp.inf, dtype=m_ref.dtype)
        l_ref[...] = jnp.zeros(l_ref.shape, dtype=l_ref.dtype)
        acc_ref[...] = jnp.zeros(acc_ref.shape, dtype=acc_ref.dtype)

    q = q_ref[0]      # (tq, D)
    k = k_ref[0]      # (tk, D)
    v = v_ref[0]      # (tk, Dv)
    inv = inv_ref[0]  # (tq, tk)

    # v1 = q @ k^T without materializing the transpose: contract feature dims.
    s = lax.dot_general(q, k, (((1,), (1,)), ((), ())),
                        preferred_element_type=jnp.float32)
    # v2 = v1 / inv_scale_factor  (reciprocal + multiply; non-approx for parity)
    s = s * pl.reciprocal(inv.astype(jnp.float32), approx=False)

    # --- online softmax over the Lk grid axis ---
    m_prev = m_ref[...]                                     # (tq, 1)
    m_new = jnp.maximum(m_prev, jnp.max(s, axis=-1, keepdims=True))
    alpha = jnp.exp(m_prev - m_new)
    e = jnp.exp(s - m_new)                                  # (tq, tk)
    l_ref[...] = alpha * l_ref[...] + jnp.sum(e, axis=-1, keepdims=True)

    p = e
    if has_mask:
        # Dropout: mask + rescale the unnormalised probabilities; the per-row
        # normalisation at finalize commutes with this elementwise op.
        p = p * (mask_ref[0] * keep_scale)

    acc_ref[...] = alpha * acc_ref[...] + jnp.dot(
        p.astype(v.dtype), v, preferred_element_type=jnp.float32)
    m_ref[...] = m_new

    @pl.when(ki == pl.num_programs(2) - 1)
    def _finalize():
        o_ref[0] = (acc_ref[...] *
                    pl.reciprocal(l_ref[...], approx=False)).astype(o_ref.dtype)


def attention(query, key, value, inv_scale_factor, dropout_p, *,
              training=False, rng_key=None, block_q=128, block_k=128):
    B, Lq, D = query.shape
    _, Lk, _ = key.shape
    Dv = value.shape[-1]
    dropout_p = float(dropout_p)

    # PyTorch F.dropout(p>=1, train=True) zeroes everything -> output is zeros.
    if training and dropout_p >= 1.0:
        return jnp.zeros((B, Lq, Dv), dtype=jnp.float32)

    use_mask = training and dropout_p > 0.0
    keep_scale = 1.0 / (1.0 - dropout_p) if use_mask else 1.0

    # Tile sizes (fall back to full extent if not evenly divisible).
    tq = block_q if Lq % block_q == 0 else Lq
    tk = block_k if Lk % block_k == 0 else Lk

    inputs = [query, key, value, inv_scale_factor]
    in_specs = [
        pl.BlockSpec((1, tq, D), lambda b, qi, ki: (b, qi, 0)),
        pl.BlockSpec((1, tk, D), lambda b, qi, ki: (b, ki, 0)),
        pl.BlockSpec((1, tk, Dv), lambda b, qi, ki: (b, ki, 0)),
        pl.BlockSpec((1, tq, tk), lambda b, qi, ki: (b, qi, ki)),
    ]
    if use_mask:
        # TODO(synk): switch to on-chip pltpu.prng_random_bits dropout with
        # per-tile seeds to avoid streaming a (B, Lq, Lk) mask; kept host-side
        # here because the TPU PRNG primitives have no CPU/interpret lowering.
        if rng_key is None:
            rng_key = jax.random.PRNGKey(0)
        keep_mask = jax.random.bernoulli(
            rng_key, 1.0 - dropout_p, (B, Lq, Lk)).astype(jnp.float32)
        inputs.append(keep_mask)
        in_specs.append(pl.BlockSpec((1, tq, tk), lambda b, qi, ki: (b, qi, ki)))

    kernel = functools.partial(_attn_kernel, keep_scale=keep_scale,
                               has_mask=use_mask)

    return pl.pallas_call(
        kernel,
        out_shape=jax.ShapeDtypeStruct((B, Lq, Dv), jnp.float32),
        grid_spec=pltpu.PrefetchScalarGridSpec(
            num_scalar_prefetch=0,
            grid=(B, Lq // tq, Lk // tk),
            in_specs=in_specs,
            out_specs=pl.BlockSpec((1, tq, Dv), lambda b, qi, ki: (b, qi, 0)),
            scratch_shapes=[
                pltpu.VMEM((tq, 1), jnp.float32),   # running row max
                pltpu.VMEM((tq, 1), jnp.float32),   # running softmax denom
                pltpu.VMEM((tq, Dv), jnp.float32),  # output accumulator
            ],
        ),
        compiler_params=pltpu.CompilerParams(
            dimension_semantics=("parallel", "parallel", "arbitrary")),
    )(*inputs)


def attention_ref(query, key, value, inv_scale_factor,
                  keep_mask=None, keep_scale=1.0):
    # Pure-JAX reference.
    s = jnp.einsum("bqd,bkd->bqk", query, key) / inv_scale_factor
    p = jax.nn.softmax(s, axis=-1)
    if keep_mask is not None:
        p = p * keep_mask * keep_scale
    return jnp.einsum("bqk,bkv->bqv", p, value)


if __name__ == "__main__":
    # Small, lane-dense demo shapes (feature dims = 128 keep loads/stores dense).
    B, Lq, Lk, D, Dv = 2, 256, 256, 128, 128
    k0 = jax.random.PRNGKey(0)
    kq, kk, kv, ki_ = jax.random.split(k0, 4)

    query = jax.random.normal(kq, (B, Lq, D), dtype=jnp.float32)
    key = jax.random.normal(kk, (B, Lk, D), dtype=jnp.float32)
    value = jax.random.normal(kv, (B, Lk, Dv), dtype=jnp.float32)
    # Keep the divisor away from zero for a numerically meaningful check.
    inv_scale_factor = jax.random.uniform(
        ki_, (B, Lq, Lk), dtype=jnp.float32, minval=0.5, maxval=1.5)

    # 1) eval mode (dropout is identity) — check against pure-JAX reference.
    out_eval = attention(query, key, value, inv_scale_factor,
                         dropout_p=1.0, training=False)
    jax.block_until_ready(out_eval)
    ref_eval = attention_ref(query, key, value, inv_scale_factor)
    assert jnp.allclose(out_eval, ref_eval, atol=1e-4, rtol=1e-4), \
        "eval-mode mismatch vs reference"

    # 2) training mode with dropout_p=1 (the module's global) -> exact zeros.
    out_p1 = attention(query, key, value, inv_scale_factor,
                       dropout_p=1.0, training=True)
    jax.block_until_ready(out_p1)
    assert out_p1.shape == (B, Lq, Dv)
    assert jnp.allclose(out_p1, 0.0), "p=1 training dropout must zero output"

    # 3) training mode with 0 < p < 1 — dropout mask path, check vs reference
    #    built with the identical mask.
    p_drop = 0.5
    mkey = jax.random.PRNGKey(42)
    out_tr = attention(query, key, value, inv_scale_factor,
                       dropout_p=p_drop, training=True, rng_key=mkey)
    jax.block_until_ready(out_tr)
    keep_mask = jax.random.bernoulli(
        mkey, 1.0 - p_drop, (B, Lq, Lk)).astype(jnp.float32)
    ref_tr = attention_ref(query, key, value, inv_scale_factor,
                           keep_mask=keep_mask, keep_scale=1.0 / (1.0 - p_drop))
    assert jnp.allclose(out_tr, ref_tr, atol=1e-4, rtol=1e-4), \
        "training-mode dropout mismatch vs reference"

    print("KERNEL_OK")
</pallas_src>

<mosaic_0001>
module attributes {stable_mosaic.version = 11 : i64} {
  func.func @_attn_kernel(%arg0: i32, %arg1: i32, %arg2: i32, %arg3: memref<1x128x128xf32, #tpu.memory_space<vmem>>, %arg4: memref<1x128x128xf32, #tpu.memory_space<vmem>>, %arg5: memref<1x128x128xf32, #tpu.memory_space<vmem>>, %arg6: memref<1x128x128xf32, #tpu.memory_space<vmem>>, %arg7: memref<1x128x128xf32, #tpu.memory_space<vmem>>, %arg8: memref<128x1xf32, #tpu.memory_space<vmem>>, %arg9: memref<128x1xf32, #tpu.memory_space<vmem>>, %arg10: memref<128x128xf32, #tpu.memory_space<vmem>>) attributes {dimension_semantics = [#tpu.dimension_semantics<parallel>, #tpu.dimension_semantics<parallel>, #tpu.dimension_semantics<arbitrary>], iteration_bounds = array<i64: 2, 2, 2>, scalar_prefetch = 0 : i64, scratch_operands = 3 : i64, tpu.core_type = #tpu.core_type<tc>, window_params = [{transform_indices = @transform_0, window_bounds = array<i64: 1, 128, 128>}, {transform_indices = @transform_1, window_bounds = array<i64: 1, 128, 128>}, {transform_indices = @transform_2, window_bounds = array<i64: 1, 128, 128>}, {transform_indices = @transform_3, window_bounds = array<i64: 1, 128, 128>}, {transform_indices = @transform_4, window_bounds = array<i64: 1, 128, 128>}]} {
    %c0_i32 = arith.constant 0 : i32
    %0 = arith.cmpi eq, %arg2, %c0_i32 : i32
    %1 = arith.extui %0 : i1 to i32
    %c0_i32_0 = arith.constant 0 : i32
    %2 = arith.cmpi ne, %1, %c0_i32_0 : i32
    scf.if %2 {
      %cst_28 = arith.constant 0xFF800000 : f32
      %39 = vector.broadcast %cst_28 : f32 to vector<128x1xf32>
      %c0_29 = arith.constant 0 : index
      %c0_30 = arith.constant 0 : index
      %40 = vector.load %arg8[%c0_29, %c0_30] : memref<128x1xf32, #tpu.memory_space<vmem>>, vector<128x1xf32>
      tpu.vector_store %arg8[%c0_29, %c0_30], %39 {strides = array<i32>} : memref<128x1xf32, #tpu.memory_space<vmem>>, vector<128x1xf32>,
      %cst_31 = arith.constant 0.000000e+00 : f32
      %41 = vector.broadcast %cst_31 : f32 to vector<128x1xf32>
      %c0_32 = arith.constant 0 : index
      %c0_33 = arith.constant 0 : index
      %42 = vector.load %arg9[%c0_32, %c0_33] : memref<128x1xf32, #tpu.memory_space<vmem>>, vector<128x1xf32>
      tpu.vector_store %arg9[%c0_32, %c0_33], %41 {strides = array<i32>} : memref<128x1xf32, #tpu.memory_space<vmem>>, vector<128x1xf32>,
      %cst_34 = arith.constant 0.000000e+00 : f32
      %43 = vector.broadcast %cst_34 : f32 to vector<128x128xf32>
      %c0_35 = arith.constant 0 : index
      %c0_36 = arith.constant 0 : index
      %44 = vector.load %arg10[%c0_35, %c0_36] : memref<128x128xf32, #tpu.memory_space<vmem>>, vector<128x128xf32>
      tpu.vector_store %arg10[%c0_35, %c0_36], %43 {strides = array<i32>} : memref<128x128xf32, #tpu.memory_space<vmem>>, vector<128x128xf32>,
    } else {
    }
    %c0 = arith.constant 0 : index
    %c0_1 = arith.constant 0 : index
    %c0_2 = arith.constant 0 : index
    %3 = vector.load %arg3[%c0, %c0_1, %c0_2] : memref<1x128x128xf32, #tpu.memory_space<vmem>>, vector<1x128x128xf32>
    %4 = vector.shape_cast %3 : vector<1x128x128xf32> to vector<128x128xf32>
    %c0_3 = arith.constant 0 : index
    %c0_4 = arith.constant 0 : index
    %c0_5 = arith.constant 0 : index
    %5 = vector.load %arg4[%c0_3, %c0_4, %c0_5] : memref<1x128x128xf32, #tpu.memory_space<vmem>>, vector<1x128x128xf32>
    %6 = vector.shape_cast %5 : vector<1x128x128xf32> to vector<128x128xf32>
    %c0_6 = arith.constant 0 : index
    %c0_7 = arith.constant 0 : index
    %c0_8 = arith.constant 0 : index
    %7 = vector.load %arg5[%c0_6, %c0_7, %c0_8] : memref<1x128x128xf32, #tpu.memory_space<vmem>>, vector<1x128x128xf32>
    %8 = vector.shape_cast %7 : vector<1x128x128xf32> to vector<128x128xf32>
    %c0_9 = arith.constant 0 : index
    %c0_10 = arith.constant 0 : index
    %c0_11 = arith.constant 0 : index
    %9 = vector.load %arg6[%c0_9, %c0_10, %c0_11] : memref<1x128x128xf32, #tpu.memory_space<vmem>>, vector<1x128x128xf32>
    %10 = vector.shape_cast %9 : vector<1x128x128xf32> to vector<128x128xf32>
    %cst = arith.constant dense<0.000000e+00> : vector<128x128xf32>
    %11 = tpu.matmul %4, %6, %cst {dimension_numbers = #tpu.dot_dimension_numbers<[1], [1], [0], [0], [0, 0, 1, 0], [], []>} : vector<128x128xf32>, vector<128x128xf32>, vector<128x128xf32> -> vector<128x128xf32>
    %12 = tpu.reciprocal %10 : vector<128x128xf32> -> vector<128x128xf32>
    %13 = arith.mulf %11, %12 : vector<128x128xf32>
    %c0_12 = arith.constant 0 : index
    %c0_13 = arith.constant 0 : index
    %14 = vector.load %arg8[%c0_12, %c0_13] : memref<128x1xf32, #tpu.memory_space<vmem>>, vector<128x1xf32>
    %cst_14 = arith.constant dense<0xFF800000> : vector<128xf32>
    %15 = vector.multi_reduction <maximumf>, %13, %cst_14 [1] : vector<128x128xf32> to vector<128xf32>
    %16 = vector.shape_cast %15 : vector<128xf32> to vector<128x1xf32>
    %17 = arith.maximumf %14, %16 : vector<128x1xf32>
    %18 = arith.subf %14, %17 : vector<128x1xf32>
    %19 = math.exp %18 : vector<128x1xf32>
    %20 = vector.broadcast %17 : vector<128x1xf32> to vector<128x128xf32>
    %21 = arith.subf %13, %20 : vector<128x128xf32>
    %22 = math.exp %21 : vector<128x128xf32>
    %c0_15 = arith.constant 0 : index
    %c0_16 = arith.constant 0 : index
    %23 = vector.load %arg9[%c0_15, %c0_16] : memref<128x1xf32, #tpu.memory_space<vmem>>, vector<128x1xf32>
    %24 = arith.mulf %19, %23 : vector<128x1xf32>
    %cst_17 = arith.constant dense<0.000000e+00> : vector<128xf32>
    %25 = vector.multi_reduction <add>, %22, %cst_17 [1] : vector<128x128xf32> to vector<128xf32>
    %26 = vector.shape_cast %25 : vector<128xf32> to vector<128x1xf32>
    %27 = arith.addf %24, %26 : vector<128x1xf32>
    %c0_18 = arith.constant 0 : index
    %c0_19 = arith.constant 0 : index
    %28 = vector.load %arg9[%c0_18, %c0_19] : memref<128x1xf32, #tpu.memory_space<vmem>>, vector<128x1xf32>
    tpu.vector_store %arg9[%c0_18, %c0_19], %27 {strides = array<i32>} : memref<128x1xf32, #tpu.memory_space<vmem>>, vector<128x1xf32>,
    %c0_20 = arith.constant 0 : index
    %c0_21 = arith.constant 0 : index
    %29 = vector.load %arg10[%c0_20, %c0_21] : memref<128x128xf32, #tpu.memory_space<vmem>>, vector<128x128xf32>
    %30 = vector.broadcast %19 : vector<128x1xf32> to vector<128x128xf32>
    %31 = arith.mulf %30, %29 : vector<128x128xf32>
    %cst_22 = arith.constant dense<0.000000e+00> : vector<128x128xf32>
    %32 = tpu.matmul %22, %8, %cst_22 {dimension_numbers = #tpu.dot_dimension_numbers<[1], [0], [0], [1], [0, 0, 1, 1], [], []>} : vector<128x128xf32>, vector<128x128xf32>, vector<128x128xf32> -> vector<128x128xf32>
    %33 = arith.addf %31, %32 : vector<128x128xf32>
    %c0_23 = arith.constant 0 : index
    %c0_24 = arith.constant 0 : index
    %34 = vector.load %arg10[%c0_23, %c0_24] : memref<128x128xf32, #tpu.memory_space<vmem>>, vector<128x128xf32>
    tpu.vector_store %arg10[%c0_23, %c0_24], %33 {strides = array<i32>} : memref<128x128xf32, #tpu.memory_space<vmem>>, vector<128x128xf32>,
    %c0_25 = arith.constant 0 : index
    %c0_26 = arith.constant 0 : index
    %35 = vector.load %arg8[%c0_25, %c0_26] : memref<128x1xf32, #tpu.memory_space<vmem>>, vector<128x1xf32>
    tpu.vector_store %arg8[%c0_25, %c0_26], %17 {strides = array<i32>} : memref<128x1xf32, #tpu.memory_space<vmem>>, vector<128x1xf32>,
    %c1_i32 = arith.constant 1 : i32
    %36 = arith.cmpi eq, %arg2, %c1_i32 : i32
    %37 = arith.extui %36 : i1 to i32
    %c0_i32_27 = arith.constant 0 : i32
    %38 = arith.cmpi ne, %37, %c0_i32_27 : i32
    scf.if %38 {
      %c0_28 = arith.constant 0 : index
      %c0_29 = arith.constant 0 : index
      %39 = vector.load %arg10[%c0_28, %c0_29] : memref<128x128xf32, #tpu.memory_space<vmem>>, vector<128x128xf32>
      %c0_30 = arith.constant 0 : index
      %c0_31 = arith.constant 0 : index
      %40 = vector.load %arg9[%c0_30, %c0_31] : memref<128x1xf32, #tpu.memory_space<vmem>>, vector<128x1xf32>
      %41 = tpu.reciprocal %40 : vector<128x1xf32> -> vector<128x1xf32>
      %42 = vector.broadcast %41 : vector<128x1xf32> to vector<128x128xf32>
      %43 = arith.mulf %39, %42 : vector<128x128xf32>
      %c0_32 = arith.constant 0 : index
      %c0_33 = arith.constant 0 : index
      %c0_34 = arith.constant 0 : index
      %44 = vector.load %arg7[%c0_32, %c0_33, %c0_34] : memref<1x128x128xf32, #tpu.memory_space<vmem>>, vector<1x128x128xf32>
      %45 = vector.shape_cast %44 : vector<1x128x128xf32> to vector<128x128xf32>
      %46 = vector.shape_cast %43 : vector<128x128xf32> to vector<1x128x128xf32>
      tpu.vector_store %arg7[%c0_32, %c0_33, %c0_34], %46 {strides = array<i32>} : memref<1x128x128xf32, #tpu.memory_space<vmem>>, vector<1x128x128xf32>,
    } else {
    }
    return
  }
  func.func @transform_0(%arg0: i32, %arg1: i32, %arg2: i32) -> (i32, i32, i32) {
    %c0_i32 = arith.constant 0 : i32
    %c0_i32_0 = arith.constant 0 : i32
    return %arg0, %arg1, %c0_i32 : i32, i32, i32
  }
  func.func @transform_1(%arg0: i32, %arg1: i32, %arg2: i32) -> (i32, i32, i32) {
    %c0_i32 = arith.constant 0 : i32
    %c0_i32_0 = arith.constant 0 : i32
    return %arg0, %arg2, %c0_i32 : i32, i32, i32
  }
  func.func @transform_2(%arg0: i32, %arg1: i32, %arg2: i32) -> (i32, i32, i32) {
    %c0_i32 = arith.constant 0 : i32
    %c0_i32_0 = arith.constant 0 : i32
    return %arg0, %arg2, %c0_i32 : i32, i32, i32
  }
  func.func @transform_3(%arg0: i32, %arg1: i32, %arg2: i32) -> (i32, i32, i32) {
    %c0_i32 = arith.constant 0 : i32
    return %arg0, %arg1, %arg2 : i32, i32, i32
  }
  func.func @transform_4(%arg0: i32, %arg1: i32, %arg2: i32) -> (i32, i32, i32) {
    %c0_i32 = arith.constant 0 : i32
    %c0_i32_0 = arith.constant 0 : i32
    return %arg0, %arg1, %c0_i32 : i32, i32, i32
  }
}

</mosaic_0001>

<llo_original>
// kernel: tpu_custom_call.1
$region0: #{tpu_custom_call.1}
  #allocation0 [shape = 'u32[]', space=smem, size = 0x4, offset = 0x4, fixed_abs, tag = 'smem constant byte address 0x4 - core index']
  #allocation1 [shape = 'u32[144,128]{1,0:T(1,128)}', space=vmem, size = 0x12000, scoped, tag = 'internal scratch']
  #allocation2 [shape = 'f32[128,1]{1,0:T(8,128)}', space=vmem, size = 0x10000, scoped, tag = 'scratch operand']
  #allocation3 [shape = 'f32[128,1]{1,0:T(8,128)}', space=vmem, size = 0x10000, scoped, tag = 'scratch operand']
  #allocation4 [shape = 'f32[128,128]{1,0:T(8,128)}', space=vmem, size = 0x10000, scoped, tag = 'scratch operand']
  %s0 = inlined_call_operand.hbm [shape: f32[2,256,128], index: 0, kind: input, shape index: {}]
  %s1 = inlined_call_operand.hbm [shape: f32[2,256,128], index: 1, kind: input, shape index: {}]
  %s2 = inlined_call_operand.hbm [shape: f32[2,256,128], index: 2, kind: input, shape index: {}]
  %s3 = inlined_call_operand.hbm [shape: f32[2,256,256], index: 3, kind: input, shape index: {}]
  %s4 = inlined_call_operand.hbm [shape: f32[2,256,128], index: 4, kind: output, shape index: {}]
  %s5 = sld [smem:[#allocation0]]
  $region73: #{tpu_custom_call.1} parent=0
    _
  %s7 = ssub.s32 1, %s5
  %s8 = scalar_select 0, %s7, %s5
  $region1: #{tpu_custom_call.1} parent=0
    #allocation5 [shape = 'u8[131072]{0}', space=vmem, size = 0x20000, scoped, tag = 'input window, operand 0']
    #allocation6 [shape = 's32[2]{0}', space=sflag, size = 0x8, scoped, tag = 'scoped memory for tpu_custom_call.1']
    #allocation7 [shape = 's32[2]{0}', space=sflag, size = 0x8, scoped, tag = 'scoped memory for tpu_custom_call.1']
    #allocation8 [shape = 'u8[131072]{0}', space=vmem, size = 0x20000, scoped, tag = 'input window, operand 1']
    #allocation9 [shape = 's32[2]{0}', space=sflag, size = 0x8, scoped, tag = 'scoped memory for tpu_custom_call.1']
    #allocation10 [shape = 'u8[131072]{0}', space=vmem, size = 0x20000, scoped, tag = 'input window, operand 2']
    #allocation11 [shape = 'u8[131072]{0}', space=vmem, size = 0x20000, scoped, tag = 'input window, operand 3']
    #allocation12 [shape = 's32[2]{0}', space=sflag, size = 0x8, scoped, tag = 'scoped memory for tpu_custom_call.1']
    #allocation13 [shape = 'u8[131072]{0}', space=vmem, size = 0x20000, scoped, tag = 'output window, operand 0']
    %9 = vsyncpa [#allocation6], 0
    %s10 = scalar_lea.sflag [#allocation6], 1
    %11 = vsyncpa %s10, 0
    %12 = vsyncpa [#allocation9], 0
    %s13 = scalar_lea.sflag [#allocation9], 1
    %14 = vsyncpa %s13, 0
    %15 = vsyncpa [#allocation12], 0
    %s16 = scalar_lea.sflag [#allocation12], 1
    %17 = vsyncpa %s16, 0
    %18 = vsyncpa [#allocation7], 0
    %s19 = scalar_lea.sflag [#allocation7], 1
    %20 = vsyncpa %s19, 0
    loop: start=0, step=1, limit=10
    $region2: #{tpu_custom_call.1} parent=1 // loop_pre_header
      _
    $region3: #{tpu_custom_call.1} parent=1 // loop_header
      %s22 = sphi 0, %s26
      %p23 = scmp.ge.s32.totalorder %s22, 10
      %s29 = sphi 0, %s48
      %s30 = sphi 0, %s44
      %s31 = sphi 0, %s40
      %s32 = sphi 0, %s29
      %s33 = sphi 0, %s30
      %s34 = sphi 0, %s31
      %s35 = sphi 0, %s32
      %s36 = sphi 0, %s33
      %s37 = sphi 0, %s34
      %s53 = sphi 0, %s55
      %s56 = sphi 0, %s53
      %s57 = sphi 0, %s56
      %s73 = sphi 0, %s57
      %s81 = sphi 0, %s83
      %s84 = sphi 0, %s81
      %s85 = sphi 0, %s84
      %s101 = sphi 0, %s85
      %s109 = sphi 0, %s111
      %s112 = sphi 0, %s109
      %s113 = sphi 0, %s112
      %s129 = sphi 0, %s113
      %s139 = sphi 0, %s141
      %s142 = sphi 0, %s139
      %s143 = sphi 0, %s142
      %s159 = sphi 0, %s143
      %s167 = sphi 0, %s169
      %s170 = sphi 0, %s167
      %s171 = sphi 0, %s170
      %s187 = sphi 0, %s171
    $region4: #{tpu_custom_call.1} parent=1 // loop_header_branch
      %25 = sbr.rel (%p23) target = $region8
    $region5: #{tpu_custom_call.1} parent=1 // loop_body
      %s27 = ssub.s32 %s22, 1
      %s28 = ssub.s32 %s22, 2
      %s38 = sadd.s32 1, %s31
      %p39 = scmp.ge.s32.totalorder %s38, 2
      %s40 = scalar_select %p39, 0, %s38
      %s41 = sadd.s32 1, %s30
      %s42 = scalar_select %p39, %s41, %s30
      %p43 = scmp.ge.s32.totalorder %s42, 2
      %s44 = scalar_select %p43, 0, %s42
      %s45 = sadd.s32 1, %s29
      %s46 = scalar_select %p43, %s45, %s29
      %p47 = scmp.ge.s32.totalorder %s46, 2
      %s48 = scalar_select %p47, 0, %s46
      %s49 = ssub.s32 %s29, %s48
      %s50 = ssub.s32 %s30, %s44
      %s51 = sor.u32 %s49, %s50
      %p52 = scmp.eq.s32.totalorder %s51, 0
      %s54 = sadd.s32 %s53, 1
      %s55 = scalar_select %p52, %s53, %s54
      %p58 = pneg %p52
      %p59 = scmp.eq.s32.totalorder %s22, 7
      %p60 = por %p58, %p59
      %p61 = scmp.ne.s32.totalorder %s53, %s56
      %p62 = scmp.eq.s32.totalorder %s22, 0
      %p63 = por %p61, %p62
      %p64 = scmp.ne.s32.totalorder %s53, %s56
      %p65 = scmp.eq.s32.totalorder %s27, 7
      %p66 = por %p64, %p65
      %p67 = scmp.ne.s32.totalorder %s56, %s57
      %p68 = scmp.eq.s32.totalorder %s27, 0
      %p69 = por %p67, %p68
      %p70 = scmp.ne.s32.totalorder %s56, %s57
      %p71 = scmp.eq.s32.totalorder %s28, 7
      %p72 = por %p70, %p71
      %p74 = scmp.ne.s32.totalorder %s57, %s73
      %p75 = scmp.eq.s32.totalorder %s28, 0
      %p76 = por %p74, %p75
      %s77 = ssub.s32 %s29, %s48
      %s78 = ssub.s32 %s31, %s40
      %s79 = sor.u32 %s77, %s78
      %p80 = scmp.eq.s32.totalorder %s79, 0
      %s82 = sadd.s32 %s81, 1
      %s83 = scalar_select %p80, %s81, %s82
      %p86 = pneg %p80
      %p87 = scmp.eq.s32.totalorder %s22, 7
      %p88 = por %p86, %p87
      %p89 = scmp.ne.s32.totalorder %s81, %s84
      %p90 = scmp.eq.s32.totalorder %s22, 0
      %p91 = por %p89, %p90
      %p92 = scmp.ne.s32.totalorder %s81, %s84
      %p93 = scmp.eq.s32.totalorder %s27, 7
      %p94 = por %p92, %p93
      %p95 = scmp.ne.s32.totalorder %s84, %s85
      %p96 = scmp.eq.s32.totalorder %s27, 0
      %p97 = por %p95, %p96
      %p98 = scmp.ne.s32.totalorder %s84, %s85
      %p99 = scmp.eq.s32.totalorder %s28, 7
      %p100 = por %p98, %p99
      %p102 = scmp.ne.s32.totalorder %s85, %s101
      %p103 = scmp.eq.s32.totalorder %s28, 0
      %p104 = por %p102, %p103
      %s105 = ssub.s32 %s29, %s48
      %s106 = ssub.s32 %s31, %s40
      %s107 = sor.u32 %s105, %s106
      %p108 = scmp.eq.s32.totalorder %s107, 0
      %s110 = sadd.s32 %s109, 1
      %s111 = scalar_select %p108, %s109, %s110
      %p114 = pneg %p108
      %p115 = scmp.eq.s32.totalorder %s22, 7
      %p116 = por %p114, %p115
      %p117 = scmp.ne.s32.totalorder %s109, %s112
      %p118 = scmp.eq.s32.totalorder %s22, 0
      %p119 = por %p117, %p118
      %p120 = scmp.ne.s32.totalorder %s109, %s112
      %p121 = scmp.eq.s32.totalorder %s27, 7
      %p122 = por %p120, %p121
      %p123 = scmp.ne.s32.totalorder %s112, %s113
      %p124 = scmp.eq.s32.totalorder %s27, 0
      %p125 = por %p123, %p124
      %p126 = scmp.ne.s32.totalorder %s112, %s113
      %p127 = scmp.eq.s32.totalorder %s28, 7
      %p128 = por %p126, %p127
      %p130 = scmp.ne.s32.totalorder %s113, %s129
      %p131 = scmp.eq.s32.totalorder %s28, 0
      %p132 = por %p130, %p131
      %s133 = ssub.s32 %s29, %s48
      %s134 = ssub.s32 %s30, %s44
      %s135 = sor.u32 %s133, %s134
      %s136 = ssub.s32 %s31, %s40
      %s137 = sor.u32 %s135, %s136
      %p138 = scmp.eq.s32.totalorder %s137, 0
      %s140 = sadd.s32 %s139, 1
      %s141 = scalar_select %p138, %s139, %s140
      %p144 = pneg %p138
      %p145 = scmp.eq.s32.totalorder %s22, 7
      %p146 = por %p144, %p145
      %p147 = scmp.ne.s32.totalorder %s139, %s142
      %p148 = scmp.eq.s32.totalorder %s22, 0
      %p149 = por %p147, %p148
      %p150 = scmp.ne.s32.totalorder %s139, %s142
      %p151 = scmp.eq.s32.totalorder %s27, 7
      %p152 = por %p150, %p151
      %p153 = scmp.ne.s32.totalorder %s142, %s143
      %p154 = scmp.eq.s32.totalorder %s27, 0
      %p155 = por %p153, %p154
      %p156 = scmp.ne.s32.totalorder %s142, %s143
      %p157 = scmp.eq.s32.totalorder %s28, 7
      %p158 = por %p156, %p157
      %p160 = scmp.ne.s32.totalorder %s143, %s159
      %p161 = scmp.eq.s32.totalorder %s28, 0
      %p162 = por %p160, %p161
      %s163 = ssub.s32 %s29, %s48
      %s164 = ssub.s32 %s30, %s44
      %s165 = sor.u32 %s163, %s164
      %p166 = scmp.eq.s32.totalorder %s165, 0
      %s168 = sadd.s32 %s167, 1
      %s169 = scalar_select %p166, %s167, %s168
      %p172 = pneg %p166
      %p173 = scmp.eq.s32.totalorder %s22, 7
      %p174 = por %p172, %p173
      %p175 = scmp.ne.s32.totalorder %s167, %s170
      %p176 = scmp.eq.s32.totalorder %s22, 0
      %p177 = por %p175, %p176
      %p178 = scmp.ne.s32.totalorder %s167, %s170
      %p179 = scmp.eq.s32.totalorder %s27, 7
      %p180 = por %p178, %p179
      %p181 = scmp.ne.s32.totalorder %s170, %s171
      %p182 = scmp.eq.s32.totalorder %s27, 0
      %p183 = por %p181, %p182
      %p184 = scmp.ne.s32.totalorder %s170, %s171
      %p185 = scmp.eq.s32.totalorder %s28, 7
      %p186 = por %p184, %p185
      %p188 = scmp.ne.s32.totalorder %s171, %s187
      %p189 = scmp.eq.s32.totalorder %s28, 0
      %p190 = por %p188, %p189
      %p191 = scmp.le.s32.totalorder 1, %s22
      %p192 = scmp.lt.s32.totalorder %s22, 9
      %p193 = pnand %p191, %p192
      %p194 = pneg %p193
      // Predicated region
      $region9: #{tpu_custom_call.1} parent=5 // pred_check
        _
      $region10: #{tpu_custom_call.1} parent=5 // pred_check_branch
        %196 = sbr.rel (%p193) target = $region12
      $region11: #{tpu_custom_call.1} parent=5 // pred_region
        %s197 = ssub.s32 %s22, 1
      $region12: #{tpu_custom_call.1} parent=5 // pred_fallthru
        _
      %p198 = scmp.lt.s32.totalorder %s22, 8
      // Predicated region
      $region13: #{tpu_custom_call.1} parent=5 // pred_check
        %p199 = pneg %p198
      $region14: #{tpu_custom_call.1} parent=5 // pred_check_branch
        %201 = sbr.rel (%p199) target = $region16
      $region15: #{tpu_custom_call.1} parent=5 // pred_region
        // Predicated region
        $region17: #{tpu_custom_call.1} parent=15 // pred_check
          %p202 = pneg %p63
        $region18: #{tpu_custom_call.1} parent=15 // pred_check_branch
          %204 = sbr.rel (%p202) target = $region20
        $region19: #{tpu_custom_call.1} parent=15 // pred_region
          %s205 = sand.u32 %s53, 1
          %s206 = scalar_lea.sflag [#allocation6], %s205
          %s207 = sand.u32 %s53, 1
          %s208 = smul.addr %s207, 128
          %s209 = scalar_lea.vmem [#allocation5], %s208
          %s210 = smul.u32 16, %s30
          %s212 = ssub.s32 2048, 2048
          %213 = vsyncadd %s206, %s212
          %s214 = smul.addr %s29, 32
          %s215 = sadd.s32 %s210, %s214
          %s216 = smul.addr %s215, 128
          %s217 = scalar_lea.hbm %s0, %s216
          %s218 = sshll.u32 %s209, 4
          %s219 = int_to_ptr.vmem [resolvable:$true] %s218
          %224 = dma.hbm_to_vmem [thread:$0]  %s217, 2048, %s219, %s206, 128, 128, 8
        $region20: #{tpu_custom_call.1} parent=15 // pred_fallthru
          _
        // Predicated region
        $region21: #{tpu_custom_call.1} parent=15 // pred_check
          %p225 = pneg %p91
        $region22: #{tpu_custom_call.1} parent=15 // pred_check_branch
          %227 = sbr.rel (%p225) target = $region24
        $region23: #{tpu_custom_call.1} parent=15 // pred_region
          %s228 = sand.u32 %s22, 1
          %s229 = scalar_lea.sflag [#allocation9], %s228
          %s230 = sand.u32 %s81, 1
          %s231 = smul.addr %s230, 128
          %s232 = scalar_lea.vmem [#allocation8], %s231
          %s233 = smul.u32 16, %s31
          %s235 = ssub.s32 2048, 2048
          %236 = vsyncadd %s229, %s235
          %s237 = smul.addr %s29, 32
          %s238 = sadd.s32 %s233, %s237
          %s239 = smul.addr %s238, 128
          %s240 = scalar_lea.hbm %s1, %s239
          %s241 = sshll.u32 %s232, 4
          %s242 = int_to_ptr.vmem [resolvable:$true] %s241
          %247 = dma.hbm_to_vmem [thread:$0]  %s240, 2048, %s242, %s229, 128, 128, 8
        $region24: #{tpu_custom_call.1} parent=15 // pred_fallthru
          _
        // Predicated region
        $region25: #{tpu_custom_call.1} parent=15 // pred_check
          %p248 = pneg %p119
        $region26: #{tpu_custom_call.1} parent=15 // pred_check_branch
          %250 = sbr.rel (%p248) target = $region28
        $region27: #{tpu_custom_call.1} parent=15 // pred_region
          %s251 = sand.u32 %s22, 1
          %s252 = scalar_lea.sflag [#allocation9], %s251
          %s253 = sand.u32 %s109, 1
          %s254 = smul.addr %s253, 128
          %s255 = scalar_lea.vmem [#allocation10], %s254
          %s256 = smul.u32 16, %s31
          %s258 = ssub.s32 2048, 2048
          %259 = vsyncadd %s252, %s258
          %s260 = smul.addr %s29, 32
          %s261 = sadd.s32 %s256, %s260
          %s262 = smul.addr %s261, 128
          %s263 = scalar_lea.hbm %s2, %s262
          %s264 = sshll.u32 %s255, 4
          %s265 = int_to_ptr.vmem [resolvable:$true] %s264
          %270 = dma.hbm_to_vmem [thread:$0]  %s263, 2048, %s265, %s252, 128, 128, 8
        $region28: #{tpu_custom_call.1} parent=15 // pred_fallthru
          _
        // Predicated region
        $region29: #{tpu_custom_call.1} parent=15 // pred_check
          %p271 = pneg %p149
        $region30: #{tpu_custom_call.1} parent=15 // pred_check_branch
          %273 = sbr.rel (%p271) target = $region32
        $region31: #{tpu_custom_call.1} parent=15 // pred_region
          %s274 = sand.u32 %s139, 1
          %s275 = scalar_lea.sflag [#allocation12], %s274
          %s276 = sand.u32 %s139, 1
          %s277 = smul.addr %s276, 128
          %s278 = scalar_lea.vmem [#allocation11], %s277
          %s279 = smul.u32 16, %s30
          %s281 = ssub.s32 2048, 2048
          %282 = vsyncadd %s275, %s281
          %s283 = smul.addr %s279, 2
          %s284 = sadd.s32 %s31, %s283
          %s285 = smul.addr %s29, 64
          %s286 = sadd.s32 %s284, %s285
          %s287 = smul.addr %s286, 128
          %s288 = scalar_lea.hbm %s3, %s287
          %s289 = sshll.u32 %s278, 4
          %s290 = int_to_ptr.vmem [resolvable:$true] %s289
          %295 = dma.hbm_to_vmem [thread:$0]  %s288, 2048, %s290, %s275, 256, 128, 8
        $region32: #{tpu_custom_call.1} parent=15 // pred_fallthru
          _
      $region16: #{tpu_custom_call.1} parent=5 // pred_fallthru
        _
      %p296 = scmp.le.s32.totalorder 1, %s22
      %p297 = scmp.lt.s32.totalorder %s22, 9
      %p298 = pnand %p296, %p297
      %p299 = pneg %p298
      // Predicated region
      $region33: #{tpu_custom_call.1} parent=5 // pred_check
        _
      $region34: #{tpu_custom_call.1} parent=5 // pred_check_branch
        %301 = sbr.rel (%p298) target = $region36
      $region35: #{tpu_custom_call.1} parent=5 // pred_region
        %s302 = ssub.s32 %s22, 1
        %s303 = sand.u32 %s56, 1
        %s304 = scalar_lea.sflag [#allocation6], %s303
        %s305 = sand.u32 %s56, 1
        %s306 = smul.addr %s305, 128
        %s307 = scalar_lea.vmem [#allocation5], %s306
        // Predicated region
        $region37: #{tpu_custom_call.1} parent=35 // pred_check
          %p308 = pneg %p69
        $region38: #{tpu_custom_call.1} parent=35 // pred_check_branch
          %310 = sbr.rel (%p308) target = $region40
        $region39: #{tpu_custom_call.1} parent=35 // pred_region
          %311 = dma.done %s304, 2048
        $region40: #{tpu_custom_call.1} parent=35 // pred_fallthru
          _
        %s312 = sand.u32 %s27, 1
        %s313 = scalar_lea.sflag [#allocation9], %s312
        %s314 = sand.u32 %s84, 1
        %s315 = smul.addr %s314, 128
        %s316 = scalar_lea.vmem [#allocation8], %s315
        // Predicated region
        $region41: #{tpu_custom_call.1} parent=35 // pred_check
          %p317 = pneg %p97
        $region42: #{tpu_custom_call.1} parent=35 // pred_check_branch
          %319 = sbr.rel (%p317) target = $region44
        $region43: #{tpu_custom_call.1} parent=35 // pred_region
          %320 = dma.done %s313, 2048
        $region44: #{tpu_custom_call.1} parent=35 // pred_fallthru
          _
        %s321 = sand.u32 %s27, 1
        %s322 = scalar_lea.sflag [#allocation9], %s321
        %s323 = sand.u32 %s112, 1
        %s324 = smul.addr %s323, 128
        %s325 = scalar_lea.vmem [#allocation10], %s324
        // Predicated region
        $region45: #{tpu_custom_call.1} parent=35 // pred_check
          %p326 = pneg %p125
        $region46: #{tpu_custom_call.1} parent=35 // pred_check_branch
          %328 = sbr.rel (%p326) target = $region48
        $region47: #{tpu_custom_call.1} parent=35 // pred_region
          %329 = dma.done %s322, 2048
        $region48: #{tpu_custom_call.1} parent=35 // pred_fallthru
          _
        %s330 = sand.u32 %s142, 1
        %s331 = scalar_lea.sflag [#allocation12], %s330
        %s332 = sand.u32 %s142, 1
        %s333 = smul.addr %s332, 128
        %s334 = scalar_lea.vmem [#allocation11], %s333
        // Predicated region
        $region49: #{tpu_custom_call.1} parent=35 // pred_check
          %p335 = pneg %p155
        $region50: #{tpu_custom_call.1} parent=35 // pred_check_branch
          %337 = sbr.rel (%p335) target = $region52
        $region51: #{tpu_custom_call.1} parent=35 // pred_region
          %338 = dma.done %s331, 2048
        $region52: #{tpu_custom_call.1} parent=35 // pred_fallthru
          _
        %s339 = sand.u32 %s56, 1
        %s340 = scalar_lea.sflag [#allocation6], %s339
        %s341 = sand.u32 %s56, 1
        %s342 = smul.addr %s341, 128
        %s343 = scalar_lea.vmem [#allocation5], %s342
        %p344 = pneg %p69
        %p345 = pneg %p66
        %s346 = sand.u32 %s27, 1
        %s347 = scalar_lea.sflag [#allocation9], %s346
        %s348 = sand.u32 %s84, 1
        %s349 = smul.addr %s348, 128
        %s350 = scalar_lea.vmem [#allocation8], %s349
        %p351 = pneg %p97
        %p352 = pneg %p94
        %s353 = sand.u32 %s27, 1
        %s354 = scalar_lea.sflag [#allocation9], %s353
        %s355 = sand.u32 %s112, 1
        %s356 = smul.addr %s355, 128
        %s357 = scalar_lea.vmem [#allocation10], %s356
        %p358 = pneg %p125
        %p359 = pneg %p122
        %s360 = sand.u32 %s142, 1
        %s361 = scalar_lea.sflag [#allocation12], %s360
        %s362 = sand.u32 %s142, 1
        %s363 = smul.addr %s362, 128
        %s364 = scalar_lea.vmem [#allocation11], %s363
        %p365 = pneg %p155
        %p366 = pneg %p152
        %p367 = pneg %p183
        %p368 = pneg %p180
        %s369 = sand.u32 %s170, 1
        %s370 = scalar_lea.sflag [#allocation7], %s369
        %s371 = sand.u32 %s170, 1
        %s372 = smul.addr %s371, 128
        %s373 = scalar_lea.vmem [#allocation13], %s372
        %s374 = smul.u32 16, %s33
        %s375 = smul.u32 16, %s34
        %s376 = smul.u32 16, %s34
        %s377 = smul.u32 16, %s33
        %s378 = smul.u32 16, %s33
        %p379 = scmp.eq.s32.totalorder %s34, 0
        // Predicated region
        $region53: #{tpu_custom_call.1} parent=35 // pred_check
          %p380 = pneg %p379
        $region54: #{tpu_custom_call.1} parent=35 // pred_check_branch
          %382 = sbr.rel (%p380) target = $region56
        $region55: #{tpu_custom_call.1} parent=35 // pred_region
          %vm383 = vcmask 7168
          %384 = vst.msk [vmem:[#allocation2] sm:$0xff] %vm383, -inf
          %385 = vst.msk [vmem:[#allocation2 + $0x8] sm:$0xff] %vm383, -inf
          %386 = vst.msk [vmem:[#allocation2 + $0x10] sm:$0xff] %vm383, -inf
          %387 = vst.msk [vmem:[#allocation2 + $0x18] sm:$0xff] %vm383, -inf
          %388 = vst.msk [vmem:[#allocation2 + $0x20] sm:$0xff] %vm383, -inf
          %389 = vst.msk [vmem:[#allocation2 + $0x28] sm:$0xff] %vm383, -inf
          %390 = vst.msk [vmem:[#allocation2 + $0x30] sm:$0xff] %vm383, -inf
          %391 = vst.msk [vmem:[#allocation2 + $0x38] sm:$0xff] %vm383, -inf
          %392 = vst.msk [vmem:[#allocation2 + $0x40] sm:$0xff] %vm383, -inf
          %393 = vst.msk [vmem:[#allocation2 + $0x48] sm:$0xff] %vm383, -inf
          %394 = vst.msk [vmem:[#allocation2 + $0x50] sm:$0xff] %vm383, -inf
          %395 = vst.msk [vmem:[#allocation2 + $0x58] sm:$0xff] %vm383, -inf
          %396 = vst.msk [vmem:[#allocation2 + $0x60] sm:$0xff] %vm383, -inf
          %397 = vst.msk [vmem:[#allocation2 + $0x68] sm:$0xff] %vm383, -inf
          %398 = vst.msk [vmem:[#allocation2 + $0x70] sm:$0xff] %vm383, -inf
          %399 = vst.msk [vmem:[#allocation2 + $0x78] sm:$0xff] %vm383, -inf
          %400 = vst.msk [vmem:[#allocation3] sm:$0xff] %vm383, 0.0
          %401 = vst.msk [vmem:[#allocation3 + $0x8] sm:$0xff] %vm383, 0.0
          %402 = vst.msk [vmem:[#allocation3 + $0x10] sm:$0xff] %vm383, 0.0
          %403 = vst.msk [vmem:[#allocation3 + $0x18] sm:$0xff] %vm383, 0.0
          %404 = vst.msk [vmem:[#allocation3 + $0x20] sm:$0xff] %vm383, 0.0
          %405 = vst.msk [vmem:[#allocation3 + $0x28] sm:$0xff] %vm383, 0.0
          %406 = vst.msk [vmem:[#allocation3 + $0x30] sm:$0xff] %vm383, 0.0
          %407 = vst.msk [vmem:[#allocation3 + $0x38] sm:$0xff] %vm383, 0.0
          %408 = vst.msk [vmem:[#allocation3 + $0x40] sm:$0xff] %vm383, 0.0
          %409 = vst.msk [vmem:[#allocation3 + $0x48] sm:$0xff] %vm383, 0.0
          %410 = vst.msk [vmem:[#allocation3 + $0x50] sm:$0xff] %vm383, 0.0
          %411 = vst.msk [vmem:[#allocation3 + $0x58] sm:$0xff] %vm383, 0.0
          %412 = vst.msk [vmem:[#allocation3 + $0x60] sm:$0xff] %vm383, 0.0
          %413 = vst.msk [vmem:[#allocation3 + $0x68] sm:$0xff] %vm383, 0.0
          %414 = vst.msk [vmem:[#allocation3 + $0x70] sm:$0xff] %vm383, 0.0
          %415 = vst.msk [vmem:[#allocation3 + $0x78] sm:$0xff] %vm383, 0.0
          %416 = vst [vmem:[#allocation4] sm:$0xff] 0.0
          %417 = vst [vmem:[#allocation4 + $0x8] sm:$0xff] 0.0
          %418 = vst [vmem:[#allocation4 + $0x10] sm:$0xff] 0.0
          %419 = vst [vmem:[#allocation4 + $0x18] sm:$0xff] 0.0
          %420 = vst [vmem:[#allocation4 + $0x20] sm:$0xff] 0.0
          %421 = vst [vmem:[#allocation4 + $0x28] sm:$0xff] 0.0
          %422 = vst [vmem:[#allocation4 + $0x30] sm:$0xff] 0.0
          %423 = vst [vmem:[#allocation4 + $0x38] sm:$0xff] 0.0
          %424 = vst [vmem:[#allocation4 + $0x40] sm:$0xff] 0.0
          %425 = vst [vmem:[#allocation4 + $0x48] sm:$0xff] 0.0
          %426 = vst [vmem:[#allocation4 + $0x50] sm:$0xff] 0.0
          %427 = vst [vmem:[#allocation4 + $0x58] sm:$0xff] 0.0
          %428 = vst [vmem:[#allocation4 + $0x60] sm:$0xff] 0.0
          %429 = vst [vmem:[#allocation4 + $0x68] sm:$0xff] 0.0
          %430 = vst [vmem:[#allocation4 + $0x70] sm:$0xff] 0.0
          %431 = vst [vmem:[#allocation4 + $0x78] sm:$0xff] 0.0
        $region56: #{tpu_custom_call.1} parent=35 // pred_fallthru
          _
        %v432 = vld [vmem:[%s307] sm:$0xff]
        %v433 = vld [vmem:[%s307 + $0x8] sm:$0xff]
        %v434 = vld [vmem:[%s307 + $0x10] sm:$0xff]
        %v435 = vld [vmem:[%s307 + $0x18] sm:$0xff]
        %v436 = vld [vmem:[%s307 + $0x20] sm:$0xff]
        %v437 = vld [vmem:[%s307 + $0x28] sm:$0xff]
        %v438 = vld [vmem:[%s307 + $0x30] sm:$0xff]
        %v439 = vld [vmem:[%s307 + $0x38] sm:$0xff]
        %v440 = vld [vmem:[%s307 + $0x40] sm:$0xff]
        %v441 = vld [vmem:[%s307 + $0x48] sm:$0xff]
        %v442 = vld [vmem:[%s307 + $0x50] sm:$0xff]
        %v443 = vld [vmem:[%s307 + $0x58] sm:$0xff]
        %v444 = vld [vmem:[%s307 + $0x60] sm:$0xff]
        %v445 = vld [vmem:[%s307 + $0x68] sm:$0xff]
        %v446 = vld [vmem:[%s307 + $0x70] sm:$0xff]
        %v447 = vld [vmem:[%s307 + $0x78] sm:$0xff]
        %v448 = vld [vmem:[%s316] sm:$0xff]
        %v449 = vld [vmem:[%s316 + $0x8] sm:$0xff]
        %v450 = vld [vmem:[%s316 + $0x10] sm:$0xff]
        %v451 = vld [vmem:[%s316 + $0x18] sm:$0xff]
        %v452 = vld [vmem:[%s316 + $0x20] sm:$0xff]
        %v453 = vld [vmem:[%s316 + $0x28] sm:$0xff]
        %v454 = vld [vmem:[%s316 + $0x30] sm:$0xff]
        %v455 = vld [vmem:[%s316 + $0x38] sm:$0xff]
        %v456 = vld [vmem:[%s316 + $0x40] sm:$0xff]
        %v457 = vld [vmem:[%s316 + $0x48] sm:$0xff]
        %v458 = vld [vmem:[%s316 + $0x50] sm:$0xff]
        %v459 = vld [vmem:[%s316 + $0x58] sm:$0xff]
        %v460 = vld [vmem:[%s316 + $0x60] sm:$0xff]
        %v461 = vld [vmem:[%s316 + $0x68] sm:$0xff]
        %v462 = vld [vmem:[%s316 + $0x70] sm:$0xff]
        %v463 = vld [vmem:[%s316 + $0x78] sm:$0xff]
        %v464 = vld [vmem:[%s325] sm:$0xff]
        %v465 = vld [vmem:[%s325 + $0x8] sm:$0xff]
        %v466 = vld [vmem:[%s325 + $0x10] sm:$0xff]
        %v467 = vld [vmem:[%s325 + $0x18] sm:$0xff]
        %v468 = vld [vmem:[%s325 + $0x20] sm:$0xff]
        %v469 = vld [vmem:[%s325 + $0x28] sm:$0xff]
        %v470 = vld [vmem:[%s325 + $0x30] sm:$0xff]
        %v471 = vld [vmem:[%s325 + $0x38] sm:$0xff]
        %v472 = vld [vmem:[%s325 + $0x40] sm:$0xff]
        %v473 = vld [vmem:[%s325 + $0x48] sm:$0xff]
        %v474 = vld [vmem:[%s325 + $0x50] sm:$0xff]
        %v475 = vld [vmem:[%s325 + $0x58] sm:$0xff]
        %v476 = vld [vmem:[%s325 + $0x60] sm:$0xff]
        %v477 = vld [vmem:[%s325 + $0x68] sm:$0xff]
        %v478 = vld [vmem:[%s325 + $0x70] sm:$0xff]
        %v479 = vld [vmem:[%s325 + $0x78] sm:$0xff]
        %v480 = vld [vmem:[%s334] sm:$0xff]
        %v481 = vld [vmem:[%s334 + $0x8] sm:$0xff]
        %v482 = vld [vmem:[%s334 + $0x10] sm:$0xff]
        %v483 = vld [vmem:[%s334 + $0x18] sm:$0xff]
        %v484 = vld [vmem:[%s334 + $0x20] sm:$0xff]
        %v485 = vld [vmem:[%s334 + $0x28] sm:$0xff]
        %v486 = vld [vmem:[%s334 + $0x30] sm:$0xff]
        %v487 = vld [vmem:[%s334 + $0x38] sm:$0xff]
        %v488 = vld [vmem:[%s334 + $0x40] sm:$0xff]
        %v489 = vld [vmem:[%s334 + $0x48] sm:$0xff]
        %v490 = vld [vmem:[%s334 + $0x50] sm:$0xff]
        %v491 = vld [vmem:[%s334 + $0x58] sm:$0xff]
        %v492 = vld [vmem:[%s334 + $0x60] sm:$0xff]
        %v493 = vld [vmem:[%s334 + $0x68] sm:$0xff]
        %v494 = vld [vmem:[%s334 + $0x70] sm:$0xff]
        %v495 = vld [vmem:[%s334 + $0x78] sm:$0xff]
        %496 = vmatprep.subr.mxu0 0.0
        %497 = vmatpush1.xpose.msra.mxu0 %v448
        %498 = vmatprep.subr.mxu0 0.0
        %499 = vmatpush1.xpose.msra.mxu0 %v449
        %500 = vmatprep.subr.mxu0 0.0
        %501 = vmatpush1.xpose.msra.mxu0 %v450
        %502 = vmatprep.subr.mxu0 0.0
        %503 = vmatpush1.xpose.msra.mxu0 %v451
        %504 = vmatprep.subr.mxu0 0.0
        %505 = vmatpush1.xpose.msra.mxu0 %v452
        %506 = vmatprep.subr.mxu0 0.0
        %507 = vmatpush1.xpose.msra.mxu0 %v453
        %508 = vmatprep.subr.mxu0 0.0
        %509 = vmatpush1.xpose.msra.mxu0 %v454
        %510 = vmatprep.subr.mxu0 0.0
        %511 = vmatpush1.xpose.msra.mxu0 %v455
        %512 = vmatprep.subr.mxu0 0.0
        %513 = vmatpush1.xpose.msra.mxu0 %v456
        %514 = vmatprep.subr.mxu0 0.0
        %515 = vmatpush1.xpose.msra.mxu0 %v457
        %516 = vmatprep.subr.mxu0 0.0
        %517 = vmatpush1.xpose.msra.mxu0 %v458
        %518 = vmatprep.subr.mxu0 0.0
        %519 = vmatpush1.xpose.msra.mxu0 %v459
        %520 = vmatprep.subr.mxu0 0.0
        %521 = vmatpush1.xpose.msra.mxu0 %v460
        %522 = vmatprep.subr.mxu0 0.0
        %523 = vmatpush1.xpose.msra.mxu0 %v461
        %524 = vmatprep.subr.mxu0 0.0
        %525 = vmatpush1.xpose.msra.mxu0 %v462
        %526 = vmatprep.subr.mxu0 0.0
        %527 = vmatpush1.xpose.msra.mxu0 %v463
        %528 = vmatprep.subr.mxu0 0.0
        %529 = vmatpush1.xpose.msra.mxu0 0.0
        %530 = vmatprep.subr.mxu0 0.0
        %531 = vmatpush1.xpose.msra.mxu0 0.0
        %532 = vmatprep.subr.mxu0 0.0
        %533 = vmatpush1.xpose.msra.mxu0 0.0
        %534 = vmatprep.subr.mxu0 0.0
        %535 = vmatpush1.xpose.msra.mxu0 0.0
        %536 = vmatprep.subr.mxu0 0.0
        %537 = vmatpush1.xpose.msra.mxu0 0.0
        %538 = vmatprep.subr.mxu0 0.0
        %539 = vmatpush1.xpose.msra.mxu0 0.0
        %540 = vmatprep.subr.mxu0 0.0
        %541 = vmatpush1.xpose.msra.mxu0 0.0
        %542 = vmatprep.subr.mxu0 0.0
        %543 = vmatpush1.xpose.msra.mxu0 0.0
        %544 = vmatprep.subr.mxu0 0.0
        %545 = vmatpush1.xpose.msra.mxu0 0.0
        %546 = vmatprep.subr.mxu0 0.0
        %547 = vmatpush1.xpose.msra.mxu0 0.0
        %548 = vmatprep.subr.mxu0 0.0
        %549 = vmatpush1.xpose.msra.mxu0 0.0
        %550 = vmatprep.subr.mxu0 0.0
        %551 = vmatpush1.xpose.msra.mxu0 0.0
        %552 = vmatprep.subr.mxu0 0.0
        %553 = vmatpush1.xpose.msra.mxu0 0.0
        %554 = vmatprep.subr.mxu0 0.0
        %555 = vmatpush1.xpose.msra.mxu0 0.0
        %556 = vmatprep.subr.mxu0 0.0
        %557 = vmatpush1.xpose.msra.mxu0 0.0
        %558 = vmatprep.subr.mxu0 0.0
        %559 = vmatpush1.xpose.msra.mxu0 0.0
        %560 = vmatprep.mubr.f32.mxu0 0.0
        %561 = vmatmul.mubr.f32.gmra.mrb[0].mxu0 %v432
        %v562 = vpop.f32.mrb[0].mxu0
        %v563 = vadd.f32 0.0, %v562
        %v564 = vpop.f32.mrb[0].mxu0
        %565 = vmatprep.mubr.f32.mxu0 0.0
        %566 = vmatmul.mubr.f32.gmra.mrb[0].mxu0 %v433
        %v567 = vpop.f32.mrb[0].mxu0
        %v568 = vadd.f32 0.0, %v567
        %v569 = vpop.f32.mrb[0].mxu0
        %570 = vmatprep.mubr.f32.mxu0 0.0
        %571 = vmatmul.mubr.f32.gmra.mrb[0].mxu0 %v434
        %v572 = vpop.f32.mrb[0].mxu0
        %v573 = vadd.f32 0.0, %v572
        %v574 = vpop.f32.mrb[0].mxu0
        %575 = vmatprep.mubr.f32.mxu0 0.0
        %576 = vmatmul.mubr.f32.gmra.mrb[0].mxu0 %v435
        %v577 = vpop.f32.mrb[0].mxu0
        %v578 = vadd.f32 0.0, %v577
        %v579 = vpop.f32.mrb[0].mxu0
        %580 = vmatprep.mubr.f32.mxu0 0.0
        %581 = vmatmul.mubr.f32.gmra.mrb[0].mxu0 %v436
        %v582 = vpop.f32.mrb[0].mxu0
        %v583 = vadd.f32 0.0, %v582
        %v584 = vpop.f32.mrb[0].mxu0
        %585 = vmatprep.mubr.f32.mxu0 0.0
        %586 = vmatmul.mubr.f32.gmra.mrb[0].mxu0 %v437
        %v587 = vpop.f32.mrb[0].mxu0
        %v588 = vadd.f32 0.0, %v587
        %v589 = vpop.f32.mrb[0].mxu0
        %590 = vmatprep.mubr.f32.mxu0 0.0
        %591 = vmatmul.mubr.f32.gmra.mrb[0].mxu0 %v438
        %v592 = vpop.f32.mrb[0].mxu0
        %v593 = vadd.f32 0.0, %v592
        %v594 = vpop.f32.mrb[0].mxu0
        %595 = vmatprep.mubr.f32.mxu0 0.0
        %596 = vmatmul.mubr.f32.gmra.mrb[0].mxu0 %v439
        %v597 = vpop.f32.mrb[0].mxu0
        %v598 = vadd.f32 0.0, %v597
        %v599 = vpop.f32.mrb[0].mxu0
        %600 = vmatprep.mubr.f32.mxu0 0.0
        %601 = vmatmul.mubr.f32.gmra.mrb[0].mxu0 %v440
        %v602 = vpop.f32.mrb[0].mxu0
        %v603 = vadd.f32 0.0, %v602
        %v604 = vpop.f32.mrb[0].mxu0
        %605 = vmatprep.mubr.f32.mxu0 0.0
        %606 = vmatmul.mubr.f32.gmra.mrb[0].mxu0 %v441
        %v607 = vpop.f32.mrb[0].mxu0
        %v608 = vadd.f32 0.0, %v607
        %v609 = vpop.f32.mrb[0].mxu0
        %610 = vmatprep.mubr.f32.mxu0 0.0
        %611 = vmatmul.mubr.f32.gmra.mrb[0].mxu0 %v442
        %v612 = vpop.f32.mrb[0].mxu0
        %v613 = vadd.f32 0.0, %v612
        %v614 = vpop.f32.mrb[0].mxu0
        %615 = vmatprep.mubr.f32.mxu0 0.0
        %616 = vmatmul.mubr.f32.gmra.mrb[0].mxu0 %v443
        %v617 = vpop.f32.mrb[0].mxu0
        %v618 = vadd.f32 0.0, %v617
        %v619 = vpop.f32.mrb[0].mxu0
        %620 = vmatprep.mubr.f32.mxu0 0.0
        %621 = vmatmul.mubr.f32.gmra.mrb[0].mxu0 %v444
        %v622 = vpop.f32.mrb[0].mxu0
        %v623 = vadd.f32 0.0, %v622
        %v624 = vpop.f32.mrb[0].mxu0
        %625 = vmatprep.mubr.f32.mxu0 0.0
        %626 = vmatmul.mubr.f32.gmra.mrb[0].mxu0 %v445
        %v627 = vpop.f32.mrb[0].mxu0
        %v628 = vadd.f32 0.0, %v627
        %v629 = vpop.f32.mrb[0].mxu0
        %630 = vmatprep.mubr.f32.mxu0 0.0
        %631 = vmatmul.mubr.f32.gmra.mrb[0].mxu0 %v446
        %v632 = vpop.f32.mrb[0].mxu0
        %v633 = vadd.f32 0.0, %v632
        %v634 = vpop.f32.mrb[0].mxu0
        %635 = vmatprep.mubr.f32.mxu0 0.0
        %636 = vmatmul.mubr.f32.gmra.mrb[0].mxu0 %v447
        %v637 = vpop.f32.mrb[0].mxu0
        %v638 = vadd.f32 0.0, %v637
        %v639 = vpop.f32.mrb[0].mxu0
        %640 = vdwg.mxu0
        %v641 = vrcp.pop %v480
        %v642 = vrcp.pop %v481
        %v643 = vrcp.pop %v482
        %v644 = vrcp.pop %v483
        %v645 = vrcp.pop %v484
        %v646 = vrcp.pop %v485
        %v647 = vrcp.pop %v486
        %v648 = vrcp.pop %v487
        %v649 = vrcp.pop %v488
        %v650 = vrcp.pop %v489
        %v651 = vrcp.pop %v490
        %v652 = vrcp.pop %v491
        %v653 = vrcp.pop %v492
        %v654 = vrcp.pop %v493
        %v655 = vrcp.pop %v494
        %v656 = vrcp.pop %v495
        %v657 = vmul.f32 %v563, %v641
        %v658 = vmul.f32 %v568, %v642
        %v659 = vmul.f32 %v573, %v643
        %v660 = vmul.f32 %v578, %v644
        %v661 = vmul.f32 %v583, %v645
        %v662 = vmul.f32 %v588, %v646
        %v663 = vmul.f32 %v593, %v647
        %v664 = vmul.f32 %v598, %v648
        %v665 = vmul.f32 %v603, %v649
        %v666 = vmul.f32 %v608, %v650
        %v667 = vmul.f32 %v613, %v651
        %v668 = vmul.f32 %v618, %v652
        %v669 = vmul.f32 %v623, %v653
        %v670 = vmul.f32 %v628, %v654
        %v671 = vmul.f32 %v633, %v655
        %v672 = vmul.f32 %v638, %v656
        %v673 = vld [vmem:[#allocation2] sm:$0xff]
        %v674 = vld [vmem:[#allocation2 + $0x8] sm:$0xff]
        %v675 = vld [vmem:[#allocation2 + $0x10] sm:$0xff]
        %v676 = vld [vmem:[#allocation2 + $0x18] sm:$0xff]
        %v677 = vld [vmem:[#allocation2 + $0x20] sm:$0xff]
        %v678 = vld [vmem:[#allocation2 + $0x28] sm:$0xff]
        %v679 = vld [vmem:[#allocation2 + $0x30] sm:$0xff]
        %v680 = vld [vmem:[#allocation2 + $0x38] sm:$0xff]
        %v681 = vld [vmem:[#allocation2 + $0x40] sm:$0xff]
        %v682 = vld [vmem:[#allocation2 + $0x48] sm:$0xff]
        %v683 = vld [vmem:[#allocation2 + $0x50] sm:$0xff]
        %v684 = vld [vmem:[#allocation2 + $0x58] sm:$0xff]
        %v685 = vld [vmem:[#allocation2 + $0x60] sm:$0xff]
        %v686 = vld [vmem:[#allocation2 + $0x68] sm:$0xff]
        %v687 = vld [vmem:[#allocation2 + $0x70] sm:$0xff]
        %v688 = vld [vmem:[#allocation2 + $0x78] sm:$0xff]
        %689 = vmax.xlane.f32.xlu0 %v657
        %v690 = vpop.xlane.xlu0 %689
        %691 = vmax.xlane.f32.xlu0 %v658
        %v692 = vpop.xlane.xlu0 %691
        %693 = vmax.xlane.f32.xlu0 %v659
        %v694 = vpop.xlane.xlu0 %693
        %695 = vmax.xlane.f32.xlu0 %v660
        %v696 = vpop.xlane.xlu0 %695
        %697 = vmax.xlane.f32.xlu0 %v661
        %v698 = vpop.xlane.xlu0 %697
        %699 = vmax.xlane.f32.xlu0 %v662
        %v700 = vpop.xlane.xlu0 %699
        %701 = vmax.xlane.f32.xlu0 %v663
        %v702 = vpop.xlane.xlu0 %701
        %703 = vmax.xlane.f32.xlu0 %v664
        %v704 = vpop.xlane.xlu0 %703
        %705 = vmax.xlane.f32.xlu0 %v665
        %v706 = vpop.xlane.xlu0 %705
        %707 = vmax.xlane.f32.xlu0 %v666
        %v708 = vpop.xlane.xlu0 %707
        %709 = vmax.xlane.f32.xlu0 %v667
        %v710 = vpop.xlane.xlu0 %709
        %711 = vmax.xlane.f32.xlu0 %v668
        %v712 = vpop.xlane.xlu0 %711
        %713 = vmax.xlane.f32.xlu0 %v669
        %v714 = vpop.xlane.xlu0 %713
        %715 = vmax.xlane.f32.xlu0 %v670
        %v716 = vpop.xlane.xlu0 %715
        %717 = vmax.xlane.f32.xlu0 %v671
        %v718 = vpop.xlane.xlu0 %717
        %719 = vmax.xlane.f32.xlu0 %v672
        %v720 = vpop.xlane.xlu0 %719
        %v721 = vmax.f32 %v673, %v690
        %v722 = vmax.f32 %v674, %v692
        %v723 = vmax.f32 %v675, %v694
        %v724 = vmax.f32 %v676, %v696
        %v725 = vmax.f32 %v677, %v698
        %v726 = vmax.f32 %v678, %v700
        %v727 = vmax.f32 %v679, %v702
        %v728 = vmax.f32 %v680, %v704
        %v729 = vmax.f32 %v681, %v706
        %v730 = vmax.f32 %v682, %v708
        %v731 = vmax.f32 %v683, %v710
        %v732 = vmax.f32 %v684, %v712
        %v733 = vmax.f32 %v685, %v714
        %v734 = vmax.f32 %v686, %v716
        %v735 = vmax.f32 %v687, %v718
        %v736 = vmax.f32 %v688, %v720
        %v737 = vsub.f32 %v673, %v721
        %v738 = vsub.f32 %v674, %v722
        %v739 = vsub.f32 %v675, %v723
        %v740 = vsub.f32 %v676, %v724
        %v741 = vsub.f32 %v677, %v725
        %v742 = vsub.f32 %v678, %v726
        %v743 = vsub.f32 %v679, %v727
        %v744 = vsub.f32 %v680, %v728
        %v745 = vsub.f32 %v681, %v729
        %v746 = vsub.f32 %v682, %v730
        %v747 = vsub.f32 %v683, %v731
        %v748 = vsub.f32 %v684, %v732
        %v749 = vsub.f32 %v685, %v733
        %v750 = vsub.f32 %v686, %v734
        %v751 = vsub.f32 %v687, %v735
        %v752 = vsub.f32 %v688, %v736
        %v753 = vmul.f32 %v737, 1.442695
        %v754 = vpow.pop %v753
        %v755 = vmul.f32 %v738, 1.442695
        %v756 = vpow.pop %v755
        %v757 = vmul.f32 %v739, 1.442695
        %v758 = vpow.pop %v757
        %v759 = vmul.f32 %v740, 1.442695
        %v760 = vpow.pop %v759
        %v761 = vmul.f32 %v741, 1.442695
        %v762 = vpow.pop %v761
        %v763 = vmul.f32 %v742, 1.442695
        %v764 = vpow.pop %v763
        %v765 = vmul.f32 %v743, 1.442695
        %v766 = vpow.pop %v765
        %v767 = vmul.f32 %v744, 1.442695
        %v768 = vpow.pop %v767
        %v769 = vmul.f32 %v745, 1.442695
        %v770 = vpow.pop %v769
        %v771 = vmul.f32 %v746, 1.442695
        %v772 = vpow.pop %v771
        %v773 = vmul.f32 %v747, 1.442695
        %v774 = vpow.pop %v773
        %v775 = vmul.f32 %v748, 1.442695
        %v776 = vpow.pop %v775
        %v777 = vmul.f32 %v749, 1.442695
        %v778 = vpow.pop %v777
        %v779 = vmul.f32 %v750, 1.442695
        %v780 = vpow.pop %v779
        %v781 = vmul.f32 %v751, 1.442695
        %v782 = vpow.pop %v781
        %v783 = vmul.f32 %v752, 1.442695
        %v784 = vpow.pop %v783
        %786 = vset.pattern.permute.xlu0 0
        %787 = vperm.xlu0 %786, %v721
        %v788 = vpop.permute.xlu0 %787
        %791 = vset.pattern.permute.xlu0 0
        %792 = vperm.xlu0 %791, %v722
        %v793 = vpop.permute.xlu0 %792
        %796 = vset.pattern.permute.xlu0 0
        %797 = vperm.xlu0 %796, %v723
        %v798 = vpop.permute.xlu0 %797
        %801 = vset.pattern.permute.xlu0 0
        %802 = vperm.xlu0 %801, %v724
        %v803 = vpop.permute.xlu0 %802
        %806 = vset.pattern.permute.xlu0 0
        %807 = vperm.xlu0 %806, %v725
        %v808 = vpop.permute.xlu0 %807
        %811 = vset.pattern.permute.xlu0 0
        %812 = vperm.xlu0 %811, %v726
        %v813 = vpop.permute.xlu0 %812
        %816 = vset.pattern.permute.xlu0 0
        %817 = vperm.xlu0 %816, %v727
        %v818 = vpop.permute.xlu0 %817
        %821 = vset.pattern.permute.xlu0 0
        %822 = vperm.xlu0 %821, %v728
        %v823 = vpop.permute.xlu0 %822
        %826 = vset.pattern.permute.xlu0 0
        %827 = vperm.xlu0 %826, %v729
        %v828 = vpop.permute.xlu0 %827
        %831 = vset.pattern.permute.xlu0 0
        %832 = vperm.xlu0 %831, %v730
        %v833 = vpop.permute.xlu0 %832
        %836 = vset.pattern.permute.xlu0 0
        %837 = vperm.xlu0 %836, %v731
        %v838 = vpop.permute.xlu0 %837
        %841 = vset.pattern.permute.xlu0 0
        %842 = vperm.xlu0 %841, %v732
        %v843 = vpop.permute.xlu0 %842
        %846 = vset.pattern.permute.xlu0 0
        %847 = vperm.xlu0 %846, %v733
        %v848 = vpop.permute.xlu0 %847
        %851 = vset.pattern.permute.xlu0 0
        %852 = vperm.xlu0 %851, %v734
        %v853 = vpop.permute.xlu0 %852
        %856 = vset.pattern.permute.xlu0 0
        %857 = vperm.xlu0 %856, %v735
        %v858 = vpop.permute.xlu0 %857
        %861 = vset.pattern.permute.xlu0 0
        %862 = vperm.xlu0 %861, %v736
        %v863 = vpop.permute.xlu0 %862
        %v865 = vsub.f32 %v657, %v788
        %v866 = vsub.f32 %v658, %v793
        %v867 = vsub.f32 %v659, %v798
        %v868 = vsub.f32 %v660, %v803
        %v869 = vsub.f32 %v661, %v808
        %v870 = vsub.f32 %v662, %v813
        %v871 = vsub.f32 %v663, %v818
        %v872 = vsub.f32 %v664, %v823
        %v873 = vsub.f32 %v665, %v828
        %v874 = vsub.f32 %v666, %v833
        %v875 = vsub.f32 %v667, %v838
        %v876 = vsub.f32 %v668, %v843
        %v877 = vsub.f32 %v669, %v848
        %v878 = vsub.f32 %v670, %v853
        %v879 = vsub.f32 %v671, %v858
        %v880 = vsub.f32 %v672, %v863
        %v881 = vmul.f32 %v865, 1.442695
        %v882 = vpow.pop %v881
        %v883 = vmul.f32 %v866, 1.442695
        %v884 = vpow.pop %v883
        %v885 = vmul.f32 %v867, 1.442695
        %v886 = vpow.pop %v885
        %v887 = vmul.f32 %v868, 1.442695
        %v888 = vpow.pop %v887
        %v889 = vmul.f32 %v869, 1.442695
        %v890 = vpow.pop %v889
        %v891 = vmul.f32 %v870, 1.442695
        %v892 = vpow.pop %v891
        %v893 = vmul.f32 %v871, 1.442695
        %v894 = vpow.pop %v893
        %v895 = vmul.f32 %v872, 1.442695
        %v896 = vpow.pop %v895
        %v897 = vmul.f32 %v873, 1.442695
        %v898 = vpow.pop %v897
        %v899 = vmul.f32 %v874, 1.442695
        %v900 = vpow.pop %v899
        %v901 = vmul.f32 %v875, 1.442695
        %v902 = vpow.pop %v901
        %v903 = vmul.f32 %v876, 1.442695
        %v904 = vpow.pop %v903
        %v905 = vmul.f32 %v877, 1.442695
        %v906 = vpow.pop %v905
        %v907 = vmul.f32 %v878, 1.442695
        %v908 = vpow.pop %v907
        %v909 = vmul.f32 %v879, 1.442695
        %v910 = vpow.pop %v909
        %v911 = vmul.f32 %v880, 1.442695
        %v912 = vpow.pop %v911
        %v913 = vld [vmem:[#allocation3] sm:$0xff]
        %v914 = vld [vmem:[#allocation3 + $0x8] sm:$0xff]
        %v915 = vld [vmem:[#allocation3 + $0x10] sm:$0xff]
        %v916 = vld [vmem:[#allocation3 + $0x18] sm:$0xff]
        %v917 = vld [vmem:[#allocation3 + $0x20] sm:$0xff]
        %v918 = vld [vmem:[#allocation3 + $0x28] sm:$0xff]
        %v919 = vld [vmem:[#allocation3 + $0x30] sm:$0xff]
        %v920 = vld [vmem:[#allocation3 + $0x38] sm:$0xff]
        %v921 = vld [vmem:[#allocation3 + $0x40] sm:$0xff]
        %v922 = vld [vmem:[#allocation3 + $0x48] sm:$0xff]
        %v923 = vld [vmem:[#allocation3 + $0x50] sm:$0xff]
        %v924 = vld [vmem:[#allocation3 + $0x58] sm:$0xff]
        %v925 = vld [vmem:[#allocation3 + $0x60] sm:$0xff]
        %v926 = vld [vmem:[#allocation3 + $0x68] sm:$0xff]
        %v927 = vld [vmem:[#allocation3 + $0x70] sm:$0xff]
        %v928 = vld [vmem:[#allocation3 + $0x78] sm:$0xff]
        %v929 = vmul.f32 %v754, %v913
        %v930 = vmul.f32 %v756, %v914
        %v931 = vmul.f32 %v758, %v915
        %v932 = vmul.f32 %v760, %v916
        %v933 = vmul.f32 %v762, %v917
        %v934 = vmul.f32 %v764, %v918
        %v935 = vmul.f32 %v766, %v919
        %v936 = vmul.f32 %v768, %v920
        %v937 = vmul.f32 %v770, %v921
        %v938 = vmul.f32 %v772, %v922
        %v939 = vmul.f32 %v774, %v923
        %v940 = vmul.f32 %v776, %v924
        %v941 = vmul.f32 %v778, %v925
        %v942 = vmul.f32 %v780, %v926
        %v943 = vmul.f32 %v782, %v927
        %v944 = vmul.f32 %v784, %v928
        %945 = vadd.xlane.f32.xlu0 %v882
        %v946 = vpop.xlane.xlu0 %945
        %947 = vadd.xlane.f32.xlu0 %v884
        %v948 = vpop.xlane.xlu0 %947
        %949 = vadd.xlane.f32.xlu0 %v886
        %v950 = vpop.xlane.xlu0 %949
        %951 = vadd.xlane.f32.xlu0 %v888
        %v952 = vpop.xlane.xlu0 %951
        %953 = vadd.xlane.f32.xlu0 %v890
        %v954 = vpop.xlane.xlu0 %953
        %955 = vadd.xlane.f32.xlu0 %v892
        %v956 = vpop.xlane.xlu0 %955
        %957 = vadd.xlane.f32.xlu0 %v894
        %v958 = vpop.xlane.xlu0 %957
        %959 = vadd.xlane.f32.xlu0 %v896
        %v960 = vpop.xlane.xlu0 %959
        %961 = vadd.xlane.f32.xlu0 %v898
        %v962 = vpop.xlane.xlu0 %961
        %963 = vadd.xlane.f32.xlu0 %v900
        %v964 = vpop.xlane.xlu0 %963
        %965 = vadd.xlane.f32.xlu0 %v902
        %v966 = vpop.xlane.xlu0 %965
        %967 = vadd.xlane.f32.xlu0 %v904
        %v968 = vpop.xlane.xlu0 %967
        %969 = vadd.xlane.f32.xlu0 %v906
        %v970 = vpop.xlane.xlu0 %969
        %971 = vadd.xlane.f32.xlu0 %v908
        %v972 = vpop.xlane.xlu0 %971
        %973 = vadd.xlane.f32.xlu0 %v910
        %v974 = vpop.xlane.xlu0 %973
        %975 = vadd.xlane.f32.xlu0 %v912
        %v976 = vpop.xlane.xlu0 %975
        %v977 = vadd.f32 %v929, %v946
        %v978 = vadd.f32 %v930, %v948
        %v979 = vadd.f32 %v931, %v950
        %v980 = vadd.f32 %v932, %v952
        %v981 = vadd.f32 %v933, %v954
        %v982 = vadd.f32 %v934, %v956
        %v983 = vadd.f32 %v935, %v958
        %v984 = vadd.f32 %v936, %v960
        %v985 = vadd.f32 %v937, %v962
        %v986 = vadd.f32 %v938, %v964
        %v987 = vadd.f32 %v939, %v966
        %v988 = vadd.f32 %v940, %v968
        %v989 = vadd.f32 %v941, %v970
        %v990 = vadd.f32 %v942, %v972
        %v991 = vadd.f32 %v943, %v974
        %v992 = vadd.f32 %v944, %v976
        %vm993 = vcmask 7168
        %994 = vst.msk [vmem:[#allocation3] sm:$0xff] %vm993, %v977
        %995 = vst.msk [vmem:[#allocation3 + $0x8] sm:$0xff] %vm993, %v978
        %996 = vst.msk [vmem:[#allocation3 + $0x10] sm:$0xff] %vm993, %v979
        %997 = vst.msk [vmem:[#allocation3 + $0x18] sm:$0xff] %vm993, %v980
        %998 = vst.msk [vmem:[#allocation3 + $0x20] sm:$0xff] %vm993, %v981
        %999 = vst.msk [vmem:[#allocation3 + $0x28] sm:$0xff] %vm993, %v982
        %1000 = vst.msk [vmem:[#allocation3 + $0x30] sm:$0xff] %vm993, %v983
        %1001 = vst.msk [vmem:[#allocation3 + $0x38] sm:$0xff] %vm993, %v984
        %1002 = vst.msk [vmem:[#allocation3 + $0x40] sm:$0xff] %vm993, %v985
        %1003 = vst.msk [vmem:[#allocation3 + $0x48] sm:$0xff] %vm993, %v986
        %1004 = vst.msk [vmem:[#allocation3 + $0x50] sm:$0xff] %vm993, %v987
        %1005 = vst.msk [vmem:[#allocation3 + $0x58] sm:$0xff] %vm993, %v988
        %1006 = vst.msk [vmem:[#allocation3 + $0x60] sm:$0xff] %vm993, %v989
        %1007 = vst.msk [vmem:[#allocation3 + $0x68] sm:$0xff] %vm993, %v990
        %1008 = vst.msk [vmem:[#allocation3 + $0x70] sm:$0xff] %vm993, %v991
        %1009 = vst.msk [vmem:[#allocation3 + $0x78] sm:$0xff] %vm993, %v992
        %v1010 = vld [vmem:[#allocation4] sm:$0xff]
        %v1011 = vld [vmem:[#allocation4 + $0x8] sm:$0xff]
        %v1012 = vld [vmem:[#allocation4 + $0x10] sm:$0xff]
        %v1013 = vld [vmem:[#allocation4 + $0x18] sm:$0xff]
        %v1014 = vld [vmem:[#allocation4 + $0x20] sm:$0xff]
        %v1015 = vld [vmem:[#allocation4 + $0x28] sm:$0xff]
        %v1016 = vld [vmem:[#allocation4 + $0x30] sm:$0xff]
        %v1017 = vld [vmem:[#allocation4 + $0x38] sm:$0xff]
        %v1018 = vld [vmem:[#allocation4 + $0x40] sm:$0xff]
        %v1019 = vld [vmem:[#allocation4 + $0x48] sm:$0xff]
        %v1020 = vld [vmem:[#allocation4 + $0x50] sm:$0xff]
        %v1021 = vld [vmem:[#allocation4 + $0x58] sm:$0xff]
        %v1022 = vld [vmem:[#allocation4 + $0x60] sm:$0xff]
        %v1023 = vld [vmem:[#allocation4 + $0x68] sm:$0xff]
        %v1024 = vld [vmem:[#allocation4 + $0x70] sm:$0xff]
        %v1025 = vld [vmem:[#allocation4 + $0x78] sm:$0xff]
        %1027 = vset.pattern.permute.xlu0 0
        %1028 = vperm.xlu0 %1027, %v754
        %v1029 = vpop.permute.xlu0 %1028
        %1032 = vset.pattern.permute.xlu0 0
        %1033 = vperm.xlu0 %1032, %v756
        %v1034 = vpop.permute.xlu0 %1033
        %1037 = vset.pattern.permute.xlu0 0
        %1038 = vperm.xlu0 %1037, %v758
        %v1039 = vpop.permute.xlu0 %1038
        %1042 = vset.pattern.permute.xlu0 0
        %1043 = vperm.xlu0 %1042, %v760
        %v1044 = vpop.permute.xlu0 %1043
        %1047 = vset.pattern.permute.xlu0 0
        %1048 = vperm.xlu0 %1047, %v762
        %v1049 = vpop.permute.xlu0 %1048
        %1052 = vset.pattern.permute.xlu0 0
        %1053 = vperm.xlu0 %1052, %v764
        %v1054 = vpop.permute.xlu0 %1053
        %1057 = vset.pattern.permute.xlu0 0
        %1058 = vperm.xlu0 %1057, %v766
        %v1059 = vpop.permute.xlu0 %1058
        %1062 = vset.pattern.permute.xlu0 0
        %1063 = vperm.xlu0 %1062, %v768
        %v1064 = vpop.permute.xlu0 %1063
        %1067 = vset.pattern.permute.xlu0 0
        %1068 = vperm.xlu0 %1067, %v770
        %v1069 = vpop.permute.xlu0 %1068
        %1072 = vset.pattern.permute.xlu0 0
        %1073 = vperm.xlu0 %1072, %v772
        %v1074 = vpop.permute.xlu0 %1073
        %1077 = vset.pattern.permute.xlu0 0
        %1078 = vperm.xlu0 %1077, %v774
        %v1079 = vpop.permute.xlu0 %1078
        %1082 = vset.pattern.permute.xlu0 0
        %1083 = vperm.xlu0 %1082, %v776
        %v1084 = vpop.permute.xlu0 %1083
        %1087 = vset.pattern.permute.xlu0 0
        %1088 = vperm.xlu0 %1087, %v778
        %v1089 = vpop.permute.xlu0 %1088
        %1092 = vset.pattern.permute.xlu0 0
        %1093 = vperm.xlu0 %1092, %v780
        %v1094 = vpop.permute.xlu0 %1093
        %1097 = vset.pattern.permute.xlu0 0
        %1098 = vperm.xlu0 %1097, %v782
        %v1099 = vpop.permute.xlu0 %1098
        %1102 = vset.pattern.permute.xlu0 0
        %1103 = vperm.xlu0 %1102, %v784
        %v1104 = vpop.permute.xlu0 %1103
        %v1106 = vmul.f32 %v1029, %v1010
        %v1107 = vmul.f32 %v1034, %v1011
        %v1108 = vmul.f32 %v1039, %v1012
        %v1109 = vmul.f32 %v1044, %v1013
        %v1110 = vmul.f32 %v1049, %v1014
        %v1111 = vmul.f32 %v1054, %v1015
        %v1112 = vmul.f32 %v1059, %v1016
        %v1113 = vmul.f32 %v1064, %v1017
        %v1114 = vmul.f32 %v1069, %v1018
        %v1115 = vmul.f32 %v1074, %v1019
        %v1116 = vmul.f32 %v1079, %v1020
        %v1117 = vmul.f32 %v1084, %v1021
        %v1118 = vmul.f32 %v1089, %v1022
        %v1119 = vmul.f32 %v1094, %v1023
        %v1120 = vmul.f32 %v1099, %v1024
        %v1121 = vmul.f32 %v1104, %v1025
        %1122 = vmatprep.subr.mxu0 0.0
        %1123 = vmatpush1.msra.mxu0 %v464
        %1124 = vmatprep.subr.mxu0 0.0
        %1125 = vmatpush1.msra.mxu0 %v465
        %1126 = vmatprep.subr.mxu0 0.0
        %1127 = vmatpush1.msra.mxu0 %v466
        %1128 = vmatprep.subr.mxu0 0.0
        %1129 = vmatpush1.msra.mxu0 %v467
        %1130 = vmatprep.subr.mxu0 0.0
        %1131 = vmatpush1.msra.mxu0 %v468
        %1132 = vmatprep.subr.mxu0 0.0
        %1133 = vmatpush1.msra.mxu0 %v469
        %1134 = vmatprep.subr.mxu0 0.0
        %1135 = vmatpush1.msra.mxu0 %v470
        %1136 = vmatprep.subr.mxu0 0.0
        %1137 = vmatpush1.msra.mxu0 %v471
        %1138 = vmatprep.subr.mxu0 0.0
        %1139 = vmatpush1.msra.mxu0 %v472
        %1140 = vmatprep.subr.mxu0 0.0
        %1141 = vmatpush1.msra.mxu0 %v473
        %1142 = vmatprep.subr.mxu0 0.0
        %1143 = vmatpush1.msra.mxu0 %v474
        %1144 = vmatprep.subr.mxu0 0.0
        %1145 = vmatpush1.msra.mxu0 %v475
        %1146 = vmatprep.subr.mxu0 0.0
        %1147 = vmatpush1.msra.mxu0 %v476
        %1148 = vmatprep.subr.mxu0 0.0
        %1149 = vmatpush1.msra.mxu0 %v477
        %1150 = vmatprep.subr.mxu0 0.0
        %1151 = vmatpush1.msra.mxu0 %v478
        %1152 = vmatprep.subr.mxu0 0.0
        %1153 = vmatpush1.msra.mxu0 %v479
        %1154 = vmatprep.subr.mxu0 0.0
        %1155 = vmatpush1.msra.mxu0 0.0
        %1156 = vmatprep.subr.mxu0 0.0
        %1157 = vmatpush1.msra.mxu0 0.0
        %1158 = vmatprep.subr.mxu0 0.0
        %1159 = vmatpush1.msra.mxu0 0.0
        %1160 = vmatprep.subr.mxu0 0.0
        %1161 = vmatpush1.msra.mxu0 0.0
        %1162 = vmatprep.subr.mxu0 0.0
        %1163 = vmatpush1.msra.mxu0 0.0
        %1164 = vmatprep.subr.mxu0 0.0
        %1165 = vmatpush1.msra.mxu0 0.0
        %1166 = vmatprep.subr.mxu0 0.0
        %1167 = vmatpush1.msra.mxu0 0.0
        %1168 = vmatprep.subr.mxu0 0.0
        %1169 = vmatpush1.msra.mxu0 0.0
        %1170 = vmatprep.subr.mxu0 0.0
        %1171 = vmatpush1.msra.mxu0 0.0
        %1172 = vmatprep.subr.mxu0 0.0
        %1173 = vmatpush1.msra.mxu0 0.0
        %1174 = vmatprep.subr.mxu0 0.0
        %1175 = vmatpush1.msra.mxu0 0.0
        %1176 = vmatprep.subr.mxu0 0.0
        %1177 = vmatpush1.msra.mxu0 0.0
        %1178 = vmatprep.subr.mxu0 0.0
        %1179 = vmatpush1.msra.mxu0 0.0
        %1180 = vmatprep.subr.mxu0 0.0
        %1181 = vmatpush1.msra.mxu0 0.0
        %1182 = vmatprep.subr.mxu0 0.0
        %1183 = vmatpush1.msra.mxu0 0.0
        %1184 = vmatprep.subr.mxu0 0.0
        %1185 = vmatpush1.msra.mxu0 0.0
        %1186 = vmatprep.mubr.f32.mxu0 0.0
        %1187 = vmatmul.mubr.f32.gmra.mrb[0].mxu0 %v882
        %v1188 = vpop.f32.mrb[0].mxu0
        %v1189 = vadd.f32 0.0, %v1188
        %v1190 = vpop.f32.mrb[0].mxu0
        %1191 = vmatprep.mubr.f32.mxu0 0.0
        %1192 = vmatmul.mubr.f32.gmra.mrb[0].mxu0 %v884
        %v1193 = vpop.f32.mrb[0].mxu0
        %v1194 = vadd.f32 0.0, %v1193
        %v1195 = vpop.f32.mrb[0].mxu0
        %1196 = vmatprep.mubr.f32.mxu0 0.0
        %1197 = vmatmul.mubr.f32.gmra.mrb[0].mxu0 %v886
        %v1198 = vpop.f32.mrb[0].mxu0
        %v1199 = vadd.f32 0.0, %v1198
        %v1200 = vpop.f32.mrb[0].mxu0
        %1201 = vmatprep.mubr.f32.mxu0 0.0
        %1202 = vmatmul.mubr.f32.gmra.mrb[0].mxu0 %v888
        %v1203 = vpop.f32.mrb[0].mxu0
        %v1204 = vadd.f32 0.0, %v1203
        %v1205 = vpop.f32.mrb[0].mxu0
        %1206 = vmatprep.mubr.f32.mxu0 0.0
        %1207 = vmatmul.mubr.f32.gmra.mrb[0].mxu0 %v890
        %v1208 = vpop.f32.mrb[0].mxu0
        %v1209 = vadd.f32 0.0, %v1208
        %v1210 = vpop.f32.mrb[0].mxu0
        %1211 = vmatprep.mubr.f32.mxu0 0.0
        %1212 = vmatmul.mubr.f32.gmra.mrb[0].mxu0 %v892
        %v1213 = vpop.f32.mrb[0].mxu0
        %v1214 = vadd.f32 0.0, %v1213
        %v1215 = vpop.f32.mrb[0].mxu0
        %1216 = vmatprep.mubr.f32.mxu0 0.0
        %1217 = vmatmul.mubr.f32.gmra.mrb[0].mxu0 %v894
        %v1218 = vpop.f32.mrb[0].mxu0
        %v1219 = vadd.f32 0.0, %v1218
        %v1220 = vpop.f32.mrb[0].mxu0
        %1221 = vmatprep.mubr.f32.mxu0 0.0
        %1222 = vmatmul.mubr.f32.gmra.mrb[0].mxu0 %v896
        %v1223 = vpop.f32.mrb[0].mxu0
        %v1224 = vadd.f32 0.0, %v1223
        %v1225 = vpop.f32.mrb[0].mxu0
        %1226 = vmatprep.mubr.f32.mxu0 0.0
        %1227 = vmatmul.mubr.f32.gmra.mrb[0].mxu0 %v898
        %v1228 = vpop.f32.mrb[0].mxu0
        %v1229 = vadd.f32 0.0, %v1228
        %v1230 = vpop.f32.mrb[0].mxu0
        %1231 = vmatprep.mubr.f32.mxu0 0.0
        %1232 = vmatmul.mubr.f32.gmra.mrb[0].mxu0 %v900
        %v1233 = vpop.f32.mrb[0].mxu0
        %v1234 = vadd.f32 0.0, %v1233
        %v1235 = vpop.f32.mrb[0].mxu0
        %1236 = vmatprep.mubr.f32.mxu0 0.0
        %1237 = vmatmul.mubr.f32.gmra.mrb[0].mxu0 %v902
        %v1238 = vpop.f32.mrb[0].mxu0
        %v1239 = vadd.f32 0.0, %v1238
        %v1240 = vpop.f32.mrb[0].mxu0
        %1241 = vmatprep.mubr.f32.mxu0 0.0
        %1242 = vmatmul.mubr.f32.gmra.mrb[0].mxu0 %v904
        %v1243 = vpop.f32.mrb[0].mxu0
        %v1244 = vadd.f32 0.0, %v1243
        %v1245 = vpop.f32.mrb[0].mxu0
        %1246 = vmatprep.mubr.f32.mxu0 0.0
        %1247 = vmatmul.mubr.f32.gmra.mrb[0].mxu0 %v906
        %v1248 = vpop.f32.mrb[0].mxu0
        %v1249 = vadd.f32 0.0, %v1248
        %v1250 = vpop.f32.mrb[0].mxu0
        %1251 = vmatprep.mubr.f32.mxu0 0.0
        %1252 = vmatmul.mubr.f32.gmra.mrb[0].mxu0 %v908
        %v1253 = vpop.f32.mrb[0].mxu0
        %v1254 = vadd.f32 0.0, %v1253
        %v1255 = vpop.f32.mrb[0].mxu0
        %1256 = vmatprep.mubr.f32.mxu0 0.0
        %1257 = vmatmul.mubr.f32.gmra.mrb[0].mxu0 %v910
        %v1258 = vpop.f32.mrb[0].mxu0
        %v1259 = vadd.f32 0.0, %v1258
        %v1260 = vpop.f32.mrb[0].mxu0
        %1261 = vmatprep.mubr.f32.mxu0 0.0
        %1262 = vmatmul.mubr.f32.gmra.mrb[0].mxu0 %v912
        %v1263 = vpop.f32.mrb[0].mxu0
        %v1264 = vadd.f32 0.0, %v1263
        %v1265 = vpop.f32.mrb[0].mxu0
        %1266 = vdwg.mxu0
        %v1267 = vadd.f32 %v1106, %v1189
        %v1268 = vadd.f32 %v1107, %v1194
        %v1269 = vadd.f32 %v1108, %v1199
        %v1270 = vadd.f32 %v1109, %v1204
        %v1271 = vadd.f32 %v1110, %v1209
        %v1272 = vadd.f32 %v1111, %v1214
        %v1273 = vadd.f32 %v1112, %v1219
        %v1274 = vadd.f32 %v1113, %v1224
        %v1275 = vadd.f32 %v1114, %v1229
        %v1276 = vadd.f32 %v1115, %v1234
        %v1277 = vadd.f32 %v1116, %v1239
        %v1278 = vadd.f32 %v1117, %v1244
        %v1279 = vadd.f32 %v1118, %v1249
        %v1280 = vadd.f32 %v1119, %v1254
        %v1281 = vadd.f32 %v1120, %v1259
        %v1282 = vadd.f32 %v1121, %v1264
        %1283 = vst [vmem:[#allocation4] sm:$0xff] %v1267
        %1284 = vst [vmem:[#allocation4 + $0x8] sm:$0xff] %v1268
        %1285 = vst [vmem:[#allocation4 + $0x10] sm:$0xff] %v1269
        %1286 = vst [vmem:[#allocation4 + $0x18] sm:$0xff] %v1270
        %1287 = vst [vmem:[#allocation4 + $0x20] sm:$0xff] %v1271
        %1288 = vst [vmem:[#allocation4 + $0x28] sm:$0xff] %v1272
        %1289 = vst [vmem:[#allocation4 + $0x30] sm:$0xff] %v1273
        %1290 = vst [vmem:[#allocation4 + $0x38] sm:$0xff] %v1274
        %1291 = vst [vmem:[#allocation4 + $0x40] sm:$0xff] %v1275
        %1292 = vst [vmem:[#allocation4 + $0x48] sm:$0xff] %v1276
        %1293 = vst [vmem:[#allocation4 + $0x50] sm:$0xff] %v1277
        %1294 = vst [vmem:[#allocation4 + $0x58] sm:$0xff] %v1278
        %1295 = vst [vmem:[#allocation4 + $0x60] sm:$0xff] %v1279
        %1296 = vst [vmem:[#allocation4 + $0x68] sm:$0xff] %v1280
        %1297 = vst [vmem:[#allocation4 + $0x70] sm:$0xff] %v1281
        %1298 = vst [vmem:[#allocation4 + $0x78] sm:$0xff] %v1282
        %1299 = vst.msk [vmem:[#allocation2] sm:$0xff] %vm993, %v721
        %1300 = vst.msk [vmem:[#allocation2 + $0x8] sm:$0xff] %vm993, %v722
        %1301 = vst.msk [vmem:[#allocation2 + $0x10] sm:$0xff] %vm993, %v723
        %1302 = vst.msk [vmem:[#allocation2 + $0x18] sm:$0xff] %vm993, %v724
        %1303 = vst.msk [vmem:[#allocation2 + $0x20] sm:$0xff] %vm993, %v725
        %1304 = vst.msk [vmem:[#allocation2 + $0x28] sm:$0xff] %vm993, %v726
        %1305 = vst.msk [vmem:[#allocation2 + $0x30] sm:$0xff] %vm993, %v727
        %1306 = vst.msk [vmem:[#allocation2 + $0x38] sm:$0xff] %vm993, %v728
        %1307 = vst.msk [vmem:[#allocation2 + $0x40] sm:$0xff] %vm993, %v729
        %1308 = vst.msk [vmem:[#allocation2 + $0x48] sm:$0xff] %vm993, %v730
        %1309 = vst.msk [vmem:[#allocation2 + $0x50] sm:$0xff] %vm993, %v731
        %1310 = vst.msk [vmem:[#allocation2 + $0x58] sm:$0xff] %vm993, %v732
        %1311 = vst.msk [vmem:[#allocation2 + $0x60] sm:$0xff] %vm993, %v733
        %1312 = vst.msk [vmem:[#allocation2 + $0x68] sm:$0xff] %vm993, %v734
        %1313 = vst.msk [vmem:[#allocation2 + $0x70] sm:$0xff] %vm993, %v735
        %1314 = vst.msk [vmem:[#allocation2 + $0x78] sm:$0xff] %vm993, %v736
        %p1315 = scmp.eq.s32.totalorder %s34, 1
        // Predicated region
        $region57: #{tpu_custom_call.1} parent=35 // pred_check
          %p1316 = pneg %p1315
        $region58: #{tpu_custom_call.1} parent=35 // pred_check_branch
          %1318 = sbr.rel (%p1316) target = $region60
        $region59: #{tpu_custom_call.1} parent=35 // pred_region
          %v1319 = vld [vmem:[#allocation4] sm:$0xff]
          %v1320 = vld [vmem:[#allocation4 + $0x8] sm:$0xff]
          %v1321 = vld [vmem:[#allocation4 + $0x10] sm:$0xff]
          %v1322 = vld [vmem:[#allocation4 + $0x18] sm:$0xff]
          %v1323 = vld [vmem:[#allocation4 + $0x20] sm:$0xff]
          %v1324 = vld [vmem:[#allocation4 + $0x28] sm:$0xff]
          %v1325 = vld [vmem:[#allocation4 + $0x30] sm:$0xff]
          %v1326 = vld [vmem:[#allocation4 + $0x38] sm:$0xff]
          %v1327 = vld [vmem:[#allocation4 + $0x40] sm:$0xff]
          %v1328 = vld [vmem:[#allocation4 + $0x48] sm:$0xff]
          %v1329 = vld [vmem:[#allocation4 + $0x50] sm:$0xff]
          %v1330 = vld [vmem:[#allocation4 + $0x58] sm:$0xff]
          %v1331 = vld [vmem:[#allocation4 + $0x60] sm:$0xff]
          %v1332 = vld [vmem:[#allocation4 + $0x68] sm:$0xff]
          %v1333 = vld [vmem:[#allocation4 + $0x70] sm:$0xff]
          %v1334 = vld [vmem:[#allocation4 + $0x78] sm:$0xff]
          %v1335 = vld [vmem:[#allocation3] sm:$0xff]
          %v1336 = vld [vmem:[#allocation3 + $0x8] sm:$0xff]
          %v1337 = vld [vmem:[#allocation3 + $0x10] sm:$0xff]
          %v1338 = vld [vmem:[#allocation3 + $0x18] sm:$0xff]
          %v1339 = vld [vmem:[#allocation3 + $0x20] sm:$0xff]
          %v1340 = vld [vmem:[#allocation3 + $0x28] sm:$0xff]
          %v1341 = vld [vmem:[#allocation3 + $0x30] sm:$0xff]
          %v1342 = vld [vmem:[#allocation3 + $0x38] sm:$0xff]
          %v1343 = vld [vmem:[#allocation3 + $0x40] sm:$0xff]
          %v1344 = vld [vmem:[#allocation3 + $0x48] sm:$0xff]
          %v1345 = vld [vmem:[#allocation3 + $0x50] sm:$0xff]
          %v1346 = vld [vmem:[#allocation3 + $0x58] sm:$0xff]
          %v1347 = vld [vmem:[#allocation3 + $0x60] sm:$0xff]
          %v1348 = vld [vmem:[#allocation3 + $0x68] sm:$0xff]
          %v1349 = vld [vmem:[#allocation3 + $0x70] sm:$0xff]
          %v1350 = vld [vmem:[#allocation3 + $0x78] sm:$0xff]
          %v1351 = vrcp.pop %v1335
          %v1352 = vrcp.pop %v1336
          %v1353 = vrcp.pop %v1337
          %v1354 = vrcp.pop %v1338
          %v1355 = vrcp.pop %v1339
          %v1356 = vrcp.pop %v1340
          %v1357 = vrcp.pop %v1341
          %v1358 = vrcp.pop %v1342
          %v1359 = vrcp.pop %v1343
          %v1360 = vrcp.pop %v1344
          %v1361 = vrcp.pop %v1345
          %v1362 = vrcp.pop %v1346
          %v1363 = vrcp.pop %v1347
          %v1364 = vrcp.pop %v1348
          %v1365 = vrcp.pop %v1349
          %v1366 = vrcp.pop %v1350
          %1368 = vset.pattern.permute.xlu0 0
          %1369 = vperm.xlu0 %1368, %v1351
          %v1370 = vpop.permute.xlu0 %1369
          %1373 = vset.pattern.permute.xlu0 0
          %1374 = vperm.xlu0 %1373, %v1352
          %v1375 = vpop.permute.xlu0 %1374
          %1378 = vset.pattern.permute.xlu0 0
          %1379 = vperm.xlu0 %1378, %v1353
          %v1380 = vpop.permute.xlu0 %1379
          %1383 = vset.pattern.permute.xlu0 0
          %1384 = vperm.xlu0 %1383, %v1354
          %v1385 = vpop.permute.xlu0 %1384
          %1388 = vset.pattern.permute.xlu0 0
          %1389 = vperm.xlu0 %1388, %v1355
          %v1390 = vpop.permute.xlu0 %1389
          %1393 = vset.pattern.permute.xlu0 0
          %1394 = vperm.xlu0 %1393, %v1356
          %v1395 = vpop.permute.xlu0 %1394
          %1398 = vset.pattern.permute.xlu0 0
          %1399 = vperm.xlu0 %1398, %v1357
          %v1400 = vpop.permute.xlu0 %1399
          %1403 = vset.pattern.permute.xlu0 0
          %1404 = vperm.xlu0 %1403, %v1358
          %v1405 = vpop.permute.xlu0 %1404
          %1408 = vset.pattern.permute.xlu0 0
          %1409 = vperm.xlu0 %1408, %v1359
          %v1410 = vpop.permute.xlu0 %1409
          %1413 = vset.pattern.permute.xlu0 0
          %1414 = vperm.xlu0 %1413, %v1360
          %v1415 = vpop.permute.xlu0 %1414
          %1418 = vset.pattern.permute.xlu0 0
          %1419 = vperm.xlu0 %1418, %v1361
          %v1420 = vpop.permute.xlu0 %1419
          %1423 = vset.pattern.permute.xlu0 0
          %1424 = vperm.xlu0 %1423, %v1362
          %v1425 = vpop.permute.xlu0 %1424
          %1428 = vset.pattern.permute.xlu0 0
          %1429 = vperm.xlu0 %1428, %v1363
          %v1430 = vpop.permute.xlu0 %1429
          %1433 = vset.pattern.permute.xlu0 0
          %1434 = vperm.xlu0 %1433, %v1364
          %v1435 = vpop.permute.xlu0 %1434
          %1438 = vset.pattern.permute.xlu0 0
          %1439 = vperm.xlu0 %1438, %v1365
          %v1440 = vpop.permute.xlu0 %1439
          %1443 = vset.pattern.permute.xlu0 0
          %1444 = vperm.xlu0 %1443, %v1366
          %v1445 = vpop.permute.xlu0 %1444
          %v1447 = vmul.f32 %v1319, %v1370
          %v1448 = vmul.f32 %v1320, %v1375
          %v1449 = vmul.f32 %v1321, %v1380
          %v1450 = vmul.f32 %v1322, %v1385
          %v1451 = vmul.f32 %v1323, %v1390
          %v1452 = vmul.f32 %v1324, %v1395
          %v1453 = vmul.f32 %v1325, %v1400
          %v1454 = vmul.f32 %v1326, %v1405
          %v1455 = vmul.f32 %v1327, %v1410
          %v1456 = vmul.f32 %v1328, %v1415
          %v1457 = vmul.f32 %v1329, %v1420
          %v1458 = vmul.f32 %v1330, %v1425
          %v1459 = vmul.f32 %v1331, %v1430
          %v1460 = vmul.f32 %v1332, %v1435
          %v1461 = vmul.f32 %v1333, %v1440
          %v1462 = vmul.f32 %v1334, %v1445
          %1463 = vst [vmem:[%s373] sm:$0xff] %v1447
          %1464 = vst [vmem:[%s373 + $0x8] sm:$0xff] %v1448
          %1465 = vst [vmem:[%s373 + $0x10] sm:$0xff] %v1449
          %1466 = vst [vmem:[%s373 + $0x18] sm:$0xff] %v1450
          %1467 = vst [vmem:[%s373 + $0x20] sm:$0xff] %v1451
          %1468 = vst [vmem:[%s373 + $0x28] sm:$0xff] %v1452
          %1469 = vst [vmem:[%s373 + $0x30] sm:$0xff] %v1453
          %1470 = vst [vmem:[%s373 + $0x38] sm:$0xff] %v1454
          %1471 = vst [vmem:[%s373 + $0x40] sm:$0xff] %v1455
          %1472 = vst [vmem:[%s373 + $0x48] sm:$0xff] %v1456
          %1473 = vst [vmem:[%s373 + $0x50] sm:$0xff] %v1457
          %1474 = vst [vmem:[%s373 + $0x58] sm:$0xff] %v1458
          %1475 = vst [vmem:[%s373 + $0x60] sm:$0xff] %v1459
          %1476 = vst [vmem:[%s373 + $0x68] sm:$0xff] %v1460
          %1477 = vst [vmem:[%s373 + $0x70] sm:$0xff] %v1461
          %1478 = vst [vmem:[%s373 + $0x78] sm:$0xff] %v1462
        $region60: #{tpu_custom_call.1} parent=35 // pred_fallthru
          _
        %s1479 = sand.u32 %s170, 1
        %s1480 = scalar_lea.sflag [#allocation7], %s1479
        %s1481 = sand.u32 %s170, 1
        %s1482 = smul.addr %s1481, 128
        %s1483 = scalar_lea.vmem [#allocation13], %s1482
        // Predicated region
        $region61: #{tpu_custom_call.1} parent=35 // pred_check
          %p1484 = pneg %p180
        $region62: #{tpu_custom_call.1} parent=35 // pred_check_branch
          %1486 = sbr.rel (%p1484) target = $region64
        $region63: #{tpu_custom_call.1} parent=35 // pred_region
          %s1487 = smul.u32 16, %s33
          %s1489 = ssub.s32 2048, 2048
          %1490 = vsyncadd %s1480, %s1489
          %s1491 = smul.addr %s32, 32
          %s1492 = sadd.s32 %s1487, %s1491
          %s1493 = smul.addr %s1492, 128
          %s1494 = scalar_lea.hbm %s4, %s1493
          %s1495 = sshll.u32 %s1483, 4
          %s1496 = int_to_ptr.vmem [resolvable:$true] %s1495
          %1501 = dma.vmem_to_hbm [thread:$0]  %s1496, 2048, %s1494, %s1480, 128, 128, 8
        $region64: #{tpu_custom_call.1} parent=35 // pred_fallthru
          _
      $region36: #{tpu_custom_call.1} parent=5 // pred_fallthru
        _
      %p1502 = scmp.le.s32.totalorder 2, %s22
      // Predicated region
      $region65: #{tpu_custom_call.1} parent=5 // pred_check
        %p1503 = pneg %p1502
      $region66: #{tpu_custom_call.1} parent=5 // pred_check_branch
        %1505 = sbr.rel (%p1503) target = $region68
      $region67: #{tpu_custom_call.1} parent=5 // pred_region
        %s1506 = ssub.s32 %s22, 2
        // Predicated region
        $region69: #{tpu_custom_call.1} parent=67 // pred_check
          %p1507 = pneg %p186
        $region70: #{tpu_custom_call.1} parent=67 // pred_check_branch
          %1509 = sbr.rel (%p1507) target = $region72
        $region71: #{tpu_custom_call.1} parent=67 // pred_region
          %s1510 = sand.u32 %s171, 1
          %s1511 = scalar_lea.sflag [#allocation7], %s1510
          %s1512 = sand.u32 %s171, 1
          %s1513 = smul.addr %s1512, 128
          %s1514 = scalar_lea.vmem [#allocation13], %s1513
          %1515 = dma.done %s1511, 2048
        $region72: #{tpu_custom_call.1} parent=67 // pred_fallthru
          _
      $region68: #{tpu_custom_call.1} parent=5 // pred_fallthru
        _
    $region6: #{tpu_custom_call.1} parent=1 // loop_footer
      %s26 = sadd.s32 1, %s22
    $region7: #{tpu_custom_call.1} parent=1 // loop_footer_branch
      %21 = sbr.rel target = $region3
    $region8: #{tpu_custom_call.1} parent=1 // loop_exit
      _
    %1516 = vsyncpa [#allocation6], 1
    %s1517 = scalar_lea.sflag [#allocation6], 1
    %1518 = vsyncpa %s1517, 1
    %1519 = vsyncpa [#allocation9], 1
    %s1520 = scalar_lea.sflag [#allocation9], 1
    %1521 = vsyncpa %s1520, 1
    %1522 = vsyncpa [#allocation12], 1
    %s1523 = scalar_lea.sflag [#allocation12], 1
    %1524 = vsyncpa %s1523, 1
    %1525 = vsyncpa [#allocation7], 1
    %s1526 = scalar_lea.sflag [#allocation7], 1
    %1527 = vsyncpa %s1526, 1

</llo_original>
